<compile_context>
chip_gen: v5e
topology: v5e:2x2
jax: 0.10.0
libtpu: 0.0.40
codegen_flags: <defaults>
</compile_context>

<pallas_src>
import functools

import jax
import jax.numpy as jnp
from jax import lax
from jax.experimental import pallas as pl
from jax.experimental.pallas import tpu as pltpu


def _round_up(a, b):
    return (a + b - 1) // b * b


def _cdiv(a, b):
    return (a + b - 1) // b


def _vmem_bytes(tile_h, tile_h_in, W_out, Wp_pad, Cin, Cout_p, KKC):
    """Per-tile VMEM budget: input dbuf + im2col + weight dbuf + bias + out dbuf."""
    return (2 * tile_h_in * Wp_pad * Cin * 2      # manual double-buffered input window (bf16)
            + tile_h * W_out * KKC * 2            # im2col scratch (bf16)
            + 2 * KKC * Cout_p * 2                # weights (auto-pipelined, 2 buffers, bf16)
            + 2 * Cout_p * 4                      # bias (f32)
            + 2 * tile_h * W_out * Cout_p * 4)    # output block (auto-pipelined, 2 buffers, f32)


def _auto_tile_h(H_out, W_out, Wp_pad, Cin, Cout_p, KKC, dil, K,
                 budget_bytes=16 * 1024 * 1024):
    """Largest output-row tile that fits the VMEM budget (>= ~512 rows per dot
    whenever the budget allows it, since we start from the full H_out)."""
    th = H_out
    while th > 1 and _vmem_bytes(th, th + dil * (K - 1), W_out, Wp_pad, Cin,
                                 Cout_p, KKC) > budget_bytes:
        th -= 1
    return max(th, 1)


def atrous_conv2d(x_nchw, weight_oihw, bias, *, rate, padding, tile_h=None):
    """Dilated conv2d, stride 1.  x: (N, Cin, H, W); weight: (Cout, Cin, K, K)."""
    N, Cin, H, W = x_nchw.shape
    Cout, Cin_w, K, K2 = weight_oihw.shape
    assert Cin_w == Cin and K == K2
    dil, pad = int(rate), int(padding)

    H_out = H + 2 * pad - dil * (K - 1)
    W_out = W + 2 * pad - dil * (K - 1)
    assert H_out > 0 and W_out > 0
    Hp, Wp = H + 2 * pad, W + 2 * pad

    Cout_p = _round_up(Cout, 128)       # lane-dense output channels (unmasked vst)
    KKC = K * K * Cin                   # im2col contraction depth
    Wp_pad = _round_up(Wp, 16)          # bf16 sublane tile; extra zero cols never read

    if tile_h is None:
        tile_h = _auto_tile_h(H_out, W_out, Wp_pad, Cin, Cout_p, KKC, dil, K)
    tile_h = max(1, min(int(tile_h), H_out))
    tile_h_in = tile_h + dil * (K - 1)          # halo'd input rows per output tile
    n_ht = _cdiv(H_out, tile_h)
    H_out_pad = n_ht * tile_h                   # overhang rows are sliced off below
    Hp_need = H_out_pad + dil * (K - 1)         # rows touched by the last tile's window

    # ---- wrapper-side packing (bf16, fused transpose/convert/pad; plain-JAX glue)
    x_nhwc = jnp.transpose(x_nchw, (0, 2, 3, 1)).astype(jnp.bfloat16)
    x_padded = jnp.pad(
        x_nhwc,
        ((0, 0), (pad, Hp_need - H - pad), (pad, Wp_pad - W - pad), (0, 0)))

    # (Cout, Cin, K, K) -> (K, K, Cin, Cout) -> (K*K*Cin, Cout_p).  Row order
    # matches the im2col column order in the kernel: tap = kh*K + kw, then Cin.
    w_flat = jnp.transpose(weight_oihw, (2, 3, 1, 0)).reshape(KKC, Cout)
    w_flat = jnp.pad(w_flat, ((0, 0), (0, Cout_p - Cout))).astype(jnp.bfloat16)
    b_row = jnp.pad(bias.astype(jnp.float32), (0, Cout_p - Cout)).reshape(1, Cout_p)

    # ---- Pallas kernel -------------------------------------------------------
    def kernel(x_hbm, w_ref, b_ref, o_ref, xwin, sem, a_ref):
        n = pl.program_id(0)
        t = pl.program_id(1)
        n_t = pl.num_programs(1)

        def start_fetch(tile_idx, slot):
            pltpu.make_async_copy(
                x_hbm.at[n, pl.ds(tile_idx * tile_h, tile_h_in)],
                xwin.at[slot], sem.at[slot]).start()

        # Manual halo'd-window double buffering: prime the first window, then
        # prefetch tile t+1 while computing tile t (h axis is "arbitrary", so
        # steps of one image run in order on one core).
        @pl.when(t == 0)
        def _():
            start_fetch(0, 0)

        slot = t % 2

        @pl.when(t + 1 < n_t)
        def _():
            start_fetch(t + 1, 1 - slot)

        pltpu.make_async_copy(
            x_hbm.at[n, pl.ds(0, tile_h_in)], xwin.at[slot], sem.at[slot]).wait()

        # im2col: each tap's shifted slice goes straight into a lane-offset
        # column block of A (Cin=128 -> aligned, unmasked stores).
        xv = xwin.at[slot]                       # (tile_h_in, Wp_pad, Cin) view
        for kh in range(K):
            for kw in range(K):
                tap = kh * K + kw
                a_ref[:, :, tap * Cin:(tap + 1) * Cin] = \
                    xv[kh * dil:kh * dil + tile_h, kw * dil:kw * dil + W_out, :]

        # Single MXU matmul with a K*K*Cin-deep contraction; f32 accumulation in
        # the MXU result path; bias added once; stored directly into o_ref.
        acc = jnp.dot(a_ref[...].reshape(tile_h * W_out, KKC), w_ref[...],
                      preferred_element_type=jnp.float32)
        acc = acc + b_ref[...]
        o_ref[...] = acc.reshape(tile_h, W_out, Cout_p).astype(o_ref.dtype)

    est = _vmem_bytes(tile_h, tile_h_in, W_out, Wp_pad, Cin, Cout_p, KKC)
    vmem_limit = int(min(64 * 1024 * 1024,
                         max(32 * 1024 * 1024, est + 8 * 1024 * 1024)))

    out = pl.pallas_call(
        kernel,
        out_shape=jax.ShapeDtypeStruct((N, H_out_pad, W_out, Cout_p), jnp.float32),
        grid_spec=pltpu.PrefetchScalarGridSpec(
            num_scalar_prefetch=0,
            grid=(N, n_ht),
            in_specs=[
                pl.BlockSpec(memory_space=pl.ANY),                    # padded image (HBM)
                pl.BlockSpec((KKC, Cout_p), lambda n, t: (0, 0)),     # packed weights
                pl.BlockSpec((1, Cout_p), lambda n, t: (0, 0)),       # bias row
            ],
            out_specs=pl.BlockSpec((None, tile_h, W_out, Cout_p),
                                   lambda n, t: (n, t, 0, 0)),
            scratch_shapes=[
                pltpu.VMEM((2, tile_h_in, Wp_pad, Cin), jnp.bfloat16),  # input windows
                pltpu.SemaphoreType.DMA((2,)),
                pltpu.VMEM((tile_h, W_out, KKC), jnp.bfloat16),         # im2col A
            ],
        ),
        compiler_params=pltpu.CompilerParams(
            dimension_semantics=("parallel", "arbitrary"),
            vmem_limit_bytes=vmem_limit,
        ),
    )(x_padded, w_flat, b_row)

    out = out[:, :H_out, :, :Cout]                 # drop row overhang + lane padding
    return jnp.transpose(out, (0, 3, 1, 2))        # -> NCHW


# ---- pure-JAX reference ------------------------------------------------------
def atrous_conv2d_reference(x_nchw, weight_oihw, bias, *, rate, padding):
    y = lax.conv_general_dilated(
        x_nchw.astype(jnp.float32), weight_oihw.astype(jnp.float32),
        window_strides=(1, 1),
        padding=[(padding, padding), (padding, padding)],
        rhs_dilation=(rate, rate),
        dimension_numbers=("NCHW", "OIHW", "NCHW"),
        precision=lax.Precision.HIGHEST,
    )
    return y + bias.reshape(1, -1, 1, 1)


# ------------------------------------------------------------------------------
if __name__ == "__main__":
    key = jax.random.PRNGKey(0)
    k_x, k_w, k_b = jax.random.split(key, 3)

    # Config 1: AtrousConv2d(128, 128, kernel_size=3, rate=2, padding=2), exactly
    # as the module is used in the watermark-removal net.  tile_h=8 exercises the
    # H-tiled, double-buffered window path (2 row tiles per image).
    N, Cin, Cout, H, W, K, RATE, PAD = 2, 128, 128, 16, 16, 3, 2, 2

    fan_in = Cin * K * K
    bound = 1.0 / float(fan_in) ** 0.5             # torch Conv2d default init scale
    x = jax.random.normal(k_x, (N, Cin, H, W), jnp.float32)
    weight = jax.random.uniform(k_w, (Cout, Cin, K, K), jnp.float32, -bound, bound)
    bias = jax.random.uniform(k_b, (Cout,), jnp.float32, -bound, bound)

    conv = jax.jit(functools.partial(atrous_conv2d, rate=RATE, padding=PAD, tile_h=8))
    out = jax.block_until_ready(conv(x, weight, bias))
    assert out.shape == (N, Cout, H, W), out.shape

    ref = atrous_conv2d_reference(x, weight, bias, rate=RATE, padding=PAD)
    rel_err = float(jnp.max(jnp.abs(out - ref)) / (jnp.max(jnp.abs(ref)) + 1e-6))
    assert rel_err < 2e-2, f"config-1 mismatch vs reference: rel max err {rel_err}"

    # Config 2: Cout < 128 (lane padding + slice-off), dil=1 / pad=1, and a
    # tile_h that does not divide H_out (output-row overhang path).
    # TODO(synk): also cover W_out not a multiple of the sublane tile (the
    # reshape then costs a relayout but stays correct).
    N2, Cin2, Cout2, H2, W2 = 1, 128, 64, 16, 16
    x2 = jax.random.normal(k_x, (N2, Cin2, H2, W2), jnp.float32)
    w2 = jax.random.uniform(k_w, (Cout2, Cin2, 3, 3), jnp.float32, -bound, bound)
    b2 = jax.random.uniform(k_b, (Cout2,), jnp.float32, -bound, bound)

    conv2 = jax.jit(functools.partial(atrous_conv2d, rate=1, padding=1, tile_h=6))
    out2 = jax.block_until_ready(conv2(x2, w2, b2))
    assert out2.shape == (N2, Cout2, H2, W2), out2.shape

    ref2 = atrous_conv2d_reference(x2, w2, b2, rate=1, padding=1)
    rel_err2 = float(jnp.max(jnp.abs(out2 - ref2)) / (jnp.max(jnp.abs(ref2)) + 1e-6))
    assert rel_err2 < 2e-2, f"config-2 mismatch vs reference: rel max err {rel_err2}"

    print("KERNEL_OK")
</pallas_src>

<mosaic_0001>
module attributes {stable_mosaic.version = 11 : i64} {
  func.func @kernel(%arg0: i32, %arg1: i32, %arg2: memref<2x20x32x128xbf16, #tpu.memory_space<any>>, %arg3: memref<1152x128xbf16, #tpu.memory_space<vmem>>, %arg4: memref<1x128xf32, #tpu.memory_space<vmem>>, %arg5: memref<1x8x16x128xf32, #tpu.memory_space<vmem>>, %arg6: memref<2x12x32x128xbf16, #tpu.memory_space<vmem>>, %arg7: memref<2x!tpu.dma_semaphore, #tpu.memory_space<semaphore_mem>>, %arg8: memref<8x16x1152xbf16, #tpu.memory_space<vmem>>) attributes {dimension_semantics = [#tpu.dimension_semantics<parallel>, #tpu.dimension_semantics<arbitrary>], iteration_bounds = array<i64: 2, 2>, scalar_prefetch = 0 : i64, scratch_operands = 3 : i64, tpu.core_type = #tpu.core_type<tc>, window_params = [{}, {pipeline_mode = #tpu.pipeline_mode<synchronous>, transform_indices = @transform_1, window_bounds = array<i64: 1152, 128>}, {pipeline_mode = #tpu.pipeline_mode<synchronous>, transform_indices = @transform_2, window_bounds = array<i64: 1, 128>}, {transform_indices = @transform_3, window_bounds = array<i64: 1, 8, 16, 128>}]} {
    %c0_i32 = arith.constant 0 : i32
    %0 = arith.cmpi eq, %arg1, %c0_i32 : i32
    %1 = arith.extui %0 : i1 to i32
    %c0_i32_0 = arith.constant 0 : i32
    %2 = arith.cmpi ne, %1, %c0_i32_0 : i32
    scf.if %2 {
      %c0_i32_95 = arith.constant 0 : i32
      %c0_i32_96 = arith.constant 0 : i32
      %c0_i32_97 = arith.constant 0 : i32
      %c0_i32_98 = arith.constant 0 : i32
      %c0_i32_99 = arith.constant 0 : i32
      %70 = tpu.memref_slice %arg2[%arg0, %c0_i32_97, %c0_i32_98, %c0_i32_99] : memref<2x20x32x128xbf16, #tpu.memory_space<any>> -> memref<1x12x32x128xbf16, #tpu.memory_space<any>>
      %71 = tpu.memref_squeeze %70 : memref<1x12x32x128xbf16, #tpu.memory_space<any>> -> memref<12x32x128xbf16, #tpu.memory_space<any>>
      %c0_i32_100 = arith.constant 0 : i32
      %c0_i32_101 = arith.constant 0 : i32
      %c0_i32_102 = arith.constant 0 : i32
      %72 = tpu.memref_slice %arg6[%c0_i32_95, %c0_i32_100, %c0_i32_101, %c0_i32_102] : memref<2x12x32x128xbf16, #tpu.memory_space<vmem>> -> memref<1x12x32x128xbf16, #tpu.memory_space<vmem>>
      %73 = tpu.memref_squeeze %72 : memref<1x12x32x128xbf16, #tpu.memory_space<vmem>> -> memref<12x32x128xbf16, #tpu.memory_space<vmem>>
      %74 = tpu.memref_slice %arg7[%c0_i32_96] : memref<2x!tpu.dma_semaphore, #tpu.memory_space<semaphore_mem>> -> memref<1x!tpu.dma_semaphore, #tpu.memory_space<semaphore_mem>>
      %75 = tpu.memref_squeeze %74 : memref<1x!tpu.dma_semaphore, #tpu.memory_space<semaphore_mem>> -> memref<!tpu.dma_semaphore, #tpu.memory_space<semaphore_mem>>
      tpu.enqueue_dma source(%71 : memref<12x32x128xbf16, #tpu.memory_space<any>>) target(%73 : memref<12x32x128xbf16, #tpu.memory_space<vmem>>) target_semaphore(%75 : memref<!tpu.dma_semaphore, #tpu.memory_space<semaphore_mem>>)
    } else {
    }
    %c2_i32 = arith.constant 2 : i32
    %c0_i32_1 = arith.constant 0 : i32
    %3 = arith.cmpi eq, %c2_i32, %c0_i32_1 : i32
    %c1_i32 = arith.constant 1 : i32
    %4 = arith.select %3, %c1_i32, %c2_i32 : i32
    %5 = arith.remsi %arg1, %4 : i32
    %c0_i32_2 = arith.constant 0 : i32
    %6 = arith.cmpi ne, %5, %c0_i32_2 : i32
    %c0_i32_3 = arith.constant 0 : i32
    %7 = arith.cmpi slt, %5, %c0_i32_3 : i32
    %c0_i32_4 = arith.constant 0 : i32
    %8 = arith.cmpi slt, %4, %c0_i32_4 : i32
    %9 = arith.xori %7, %8 : i1
    %10 = arith.andi %9, %6 : i1
    %11 = arith.addi %5, %4 : i32
    %12 = arith.select %10, %11, %5 : i32
    %c1_i32_5 = arith.constant 1 : i32
    %13 = arith.addi %arg1, %c1_i32_5 : i32
    %c2_i32_6 = arith.constant 2 : i32
    %14 = arith.cmpi slt, %13, %c2_i32_6 : i32
    %15 = arith.extui %14 : i1 to i32
    %c0_i32_7 = arith.constant 0 : i32
    %16 = arith.cmpi ne, %15, %c0_i32_7 : i32
    scf.if %16 {
      %c1_i32_95 = arith.constant 1 : i32
      %70 = arith.addi %arg1, %c1_i32_95 : i32
      %c1_i32_96 = arith.constant 1 : i32
      %71 = arith.subi %c1_i32_96, %12 : i32
      %c8_i32 = arith.constant 8 : i32
      %72 = arith.muli %70, %c8_i32 : i32
      %c0_i32_97 = arith.constant 0 : i32
      %c0_i32_98 = arith.constant 0 : i32
      %73 = tpu.memref_slice %arg2[%arg0, %72, %c0_i32_97, %c0_i32_98] : memref<2x20x32x128xbf16, #tpu.memory_space<any>> -> memref<1x12x32x128xbf16, #tpu.memory_space<any>>
      %74 = tpu.memref_squeeze %73 : memref<1x12x32x128xbf16, #tpu.memory_space<any>> -> memref<12x32x128xbf16, #tpu.memory_space<any>>
      %c0_i32_99 = arith.constant 0 : i32
      %c0_i32_100 = arith.constant 0 : i32
      %c0_i32_101 = arith.constant 0 : i32
      %75 = tpu.memref_slice %arg6[%71, %c0_i32_99, %c0_i32_100, %c0_i32_101] : memref<2x12x32x128xbf16, #tpu.memory_space<vmem>> -> memref<1x12x32x128xbf16, #tpu.memory_space<vmem>>
      %76 = tpu.memref_squeeze %75 : memref<1x12x32x128xbf16, #tpu.memory_space<vmem>> -> memref<12x32x128xbf16, #tpu.memory_space<vmem>>
      %77 = tpu.memref_slice %arg7[%71] : memref<2x!tpu.dma_semaphore, #tpu.memory_space<semaphore_mem>> -> memref<1x!tpu.dma_semaphore, #tpu.memory_space<semaphore_mem>>
      %78 = tpu.memref_squeeze %77 : memref<1x!tpu.dma_semaphore, #tpu.memory_space<semaphore_mem>> -> memref<!tpu.dma_semaphore, #tpu.memory_space<semaphore_mem>>
      tpu.enqueue_dma source(%74 : memref<12x32x128xbf16, #tpu.memory_space<any>>) target(%76 : memref<12x32x128xbf16, #tpu.memory_space<vmem>>) target_semaphore(%78 : memref<!tpu.dma_semaphore, #tpu.memory_space<semaphore_mem>>)
    } else {
    }
    %c0_i32_8 = arith.constant 0 : i32
    %c0_i32_9 = arith.constant 0 : i32
    %c0_i32_10 = arith.constant 0 : i32
    %17 = tpu.memref_slice %arg2[%arg0, %c0_i32_8, %c0_i32_9, %c0_i32_10] : memref<2x20x32x128xbf16, #tpu.memory_space<any>> -> memref<1x12x32x128xbf16, #tpu.memory_space<any>>
    %18 = tpu.memref_squeeze %17 : memref<1x12x32x128xbf16, #tpu.memory_space<any>> -> memref<12x32x128xbf16, #tpu.memory_space<any>>
    %c0_i32_11 = arith.constant 0 : i32
    %c0_i32_12 = arith.constant 0 : i32
    %c0_i32_13 = arith.constant 0 : i32
    %19 = tpu.memref_slice %arg6[%12, %c0_i32_11, %c0_i32_12, %c0_i32_13] : memref<2x12x32x128xbf16, #tpu.memory_space<vmem>> -> memref<1x12x32x128xbf16, #tpu.memory_space<vmem>>
    %20 = tpu.memref_squeeze %19 : memref<1x12x32x128xbf16, #tpu.memory_space<vmem>> -> memref<12x32x128xbf16, #tpu.memory_space<vmem>>
    %21 = tpu.memref_slice %arg7[%12] : memref<2x!tpu.dma_semaphore, #tpu.memory_space<semaphore_mem>> -> memref<1x!tpu.dma_semaphore, #tpu.memory_space<semaphore_mem>>
    %22 = tpu.memref_squeeze %21 : memref<1x!tpu.dma_semaphore, #tpu.memory_space<semaphore_mem>> -> memref<!tpu.dma_semaphore, #tpu.memory_space<semaphore_mem>>
    tpu.wait_dma2 semaphore(%22 : memref<!tpu.dma_semaphore, #tpu.memory_space<semaphore_mem>>) src(%18 : memref<12x32x128xbf16, #tpu.memory_space<any>>) dst(%20 : memref<12x32x128xbf16, #tpu.memory_space<vmem>>)
    %c0_i32_14 = arith.constant 0 : i32
    %c0_i32_15 = arith.constant 0 : i32
    %c0_i32_16 = arith.constant 0 : i32
    %23 = tpu.memref_slice %arg6[%12, %c0_i32_14, %c0_i32_15, %c0_i32_16] : memref<2x12x32x128xbf16, #tpu.memory_space<vmem>> -> memref<1x12x32x128xbf16, #tpu.memory_space<vmem>>
    %24 = tpu.memref_squeeze %23 : memref<1x12x32x128xbf16, #tpu.memory_space<vmem>> -> memref<12x32x128xbf16, #tpu.memory_space<vmem>>
    %c0 = arith.constant 0 : index
    %c0_17 = arith.constant 0 : index
    %c0_18 = arith.constant 0 : index
    %25 = vector.load %24[%c0, %c0_17, %c0_18] : memref<12x32x128xbf16, #tpu.memory_space<vmem>>, vector<8x16x128xbf16>
    %c0_19 = arith.constant 0 : index
    %c0_20 = arith.constant 0 : index
    %c0_21 = arith.constant 0 : index
    %26 = vector.load %arg8[%c0_19, %c0_20, %c0_21] : memref<8x16x1152xbf16, #tpu.memory_space<vmem>>, vector<8x16x128xbf16>
    tpu.vector_store %arg8[%c0_19, %c0_20, %c0_21], %25 {strides = array<i32>} : memref<8x16x1152xbf16, #tpu.memory_space<vmem>>, vector<8x16x128xbf16>,
    %c0_i32_22 = arith.constant 0 : i32
    %c0_i32_23 = arith.constant 0 : i32
    %c0_i32_24 = arith.constant 0 : i32
    %27 = tpu.memref_slice %arg6[%12, %c0_i32_22, %c0_i32_23, %c0_i32_24] : memref<2x12x32x128xbf16, #tpu.memory_space<vmem>> -> memref<1x12x32x128xbf16, #tpu.memory_space<vmem>>
    %28 = tpu.memref_squeeze %27 : memref<1x12x32x128xbf16, #tpu.memory_space<vmem>> -> memref<12x32x128xbf16, #tpu.memory_space<vmem>>
    %c0_25 = arith.constant 0 : index
    %c2 = arith.constant 2 : index
    %c0_26 = arith.constant 0 : index
    %29 = vector.load %28[%c0_25, %c2, %c0_26] : memref<12x32x128xbf16, #tpu.memory_space<vmem>>, vector<8x16x128xbf16>
    %c0_27 = arith.constant 0 : index
    %c0_28 = arith.constant 0 : index
    %c128 = arith.constant 128 : index
    %30 = vector.load %arg8[%c0_27, %c0_28, %c128] : memref<8x16x1152xbf16, #tpu.memory_space<vmem>>, vector<8x16x128xbf16>
    tpu.vector_store %arg8[%c0_27, %c0_28, %c128], %29 {strides = array<i32>} : memref<8x16x1152xbf16, #tpu.memory_space<vmem>>, vector<8x16x128xbf16>,
    %c0_i32_29 = arith.constant 0 : i32
    %c0_i32_30 = arith.constant 0 : i32
    %c0_i32_31 = arith.constant 0 : i32
    %31 = tpu.memref_slice %arg6[%12, %c0_i32_29, %c0_i32_30, %c0_i32_31] : memref<2x12x32x128xbf16, #tpu.memory_space<vmem>> -> memref<1x12x32x128xbf16, #tpu.memory_space<vmem>>
    %32 = tpu.memref_squeeze %31 : memref<1x12x32x128xbf16, #tpu.memory_space<vmem>> -> memref<12x32x128xbf16, #tpu.memory_space<vmem>>
    %c0_32 = arith.constant 0 : index
    %c4 = arith.constant 4 : index
    %c0_33 = arith.constant 0 : index
    %33 = vector.load %32[%c0_32, %c4, %c0_33] : memref<12x32x128xbf16, #tpu.memory_space<vmem>>, vector<8x16x128xbf16>
    %c0_34 = arith.constant 0 : index
    %c0_35 = arith.constant 0 : index
    %c256 = arith.constant 256 : index
    %34 = vector.load %arg8[%c0_34, %c0_35, %c256] : memref<8x16x1152xbf16, #tpu.memory_space<vmem>>, vector<8x16x128xbf16>
    tpu.vector_store %arg8[%c0_34, %c0_35, %c256], %33 {strides = array<i32>} : memref<8x16x1152xbf16, #tpu.memory_space<vmem>>, vector<8x16x128xbf16>,
    %c0_i32_36 = arith.constant 0 : i32
    %c0_i32_37 = arith.constant 0 : i32
    %c0_i32_38 = arith.constant 0 : i32
    %35 = tpu.memref_slice %arg6[%12, %c0_i32_36, %c0_i32_37, %c0_i32_38] : memref<2x12x32x128xbf16, #tpu.memory_space<vmem>> -> memref<1x12x32x128xbf16, #tpu.memory_space<vmem>>
    %36 = tpu.memref_squeeze %35 : memref<1x12x32x128xbf16, #tpu.memory_space<vmem>> -> memref<12x32x128xbf16, #tpu.memory_space<vmem>>
    %c2_39 = arith.constant 2 : index
    %c0_40 = arith.constant 0 : index
    %c0_41 = arith.constant 0 : index
    %37 = vector.load %36[%c2_39, %c0_40, %c0_41] : memref<12x32x128xbf16, #tpu.memory_space<vmem>>, vector<8x16x128xbf16>
    %c0_42 = arith.constant 0 : index
    %c0_43 = arith.constant 0 : index
    %c384 = arith.constant 384 : index
    %38 = vector.load %arg8[%c0_42, %c0_43, %c384] : memref<8x16x1152xbf16, #tpu.memory_space<vmem>>, vector<8x16x128xbf16>
    tpu.vector_store %arg8[%c0_42, %c0_43, %c384], %37 {strides = array<i32>} : memref<8x16x1152xbf16, #tpu.memory_space<vmem>>, vector<8x16x128xbf16>,
    %c0_i32_44 = arith.constant 0 : i32
    %c0_i32_45 = arith.constant 0 : i32
    %c0_i32_46 = arith.constant 0 : i32
    %39 = tpu.memref_slice %arg6[%12, %c0_i32_44, %c0_i32_45, %c0_i32_46] : memref<2x12x32x128xbf16, #tpu.memory_space<vmem>> -> memref<1x12x32x128xbf16, #tpu.memory_space<vmem>>
    %40 = tpu.memref_squeeze %39 : memref<1x12x32x128xbf16, #tpu.memory_space<vmem>> -> memref<12x32x128xbf16, #tpu.memory_space<vmem>>
    %c2_47 = arith.constant 2 : index
    %c2_48 = arith.constant 2 : index
    %c0_49 = arith.constant 0 : index
    %41 = vector.load %40[%c2_47, %c2_48, %c0_49] : memref<12x32x128xbf16, #tpu.memory_space<vmem>>, vector<8x16x128xbf16>
    %c0_50 = arith.constant 0 : index
    %c0_51 = arith.constant 0 : index
    %c512 = arith.constant 512 : index
    %42 = vector.load %arg8[%c0_50, %c0_51, %c512] : memref<8x16x1152xbf16, #tpu.memory_space<vmem>>, vector<8x16x128xbf16>
    tpu.vector_store %arg8[%c0_50, %c0_51, %c512], %41 {strides = array<i32>} : memref<8x16x1152xbf16, #tpu.memory_space<vmem>>, vector<8x16x128xbf16>,
    %c0_i32_52 = arith.constant 0 : i32
    %c0_i32_53 = arith.constant 0 : i32
    %c0_i32_54 = arith.constant 0 : i32
    %43 = tpu.memref_slice %arg6[%12, %c0_i32_52, %c0_i32_53, %c0_i32_54] : memref<2x12x32x128xbf16, #tpu.memory_space<vmem>> -> memref<1x12x32x128xbf16, #tpu.memory_space<vmem>>
    %44 = tpu.memref_squeeze %43 : memref<1x12x32x128xbf16, #tpu.memory_space<vmem>> -> memref<12x32x128xbf16, #tpu.memory_space<vmem>>
    %c2_55 = arith.constant 2 : index
    %c4_56 = arith.constant 4 : index
    %c0_57 = arith.constant 0 : index
    %45 = vector.load %44[%c2_55, %c4_56, %c0_57] : memref<12x32x128xbf16, #tpu.memory_space<vmem>>, vector<8x16x128xbf16>
    %c0_58 = arith.constant 0 : index
    %c0_59 = arith.constant 0 : index
    %c640 = arith.constant 640 : index
    %46 = vector.load %arg8[%c0_58, %c0_59, %c640] : memref<8x16x1152xbf16, #tpu.memory_space<vmem>>, vector<8x16x128xbf16>
    tpu.vector_store %arg8[%c0_58, %c0_59, %c640], %45 {strides = array<i32>} : memref<8x16x1152xbf16, #tpu.memory_space<vmem>>, vector<8x16x128xbf16>,
    %c0_i32_60 = arith.constant 0 : i32
    %c0_i32_61 = arith.constant 0 : i32
    %c0_i32_62 = arith.constant 0 : i32
    %47 = tpu.memref_slice %arg6[%12, %c0_i32_60, %c0_i32_61, %c0_i32_62] : memref<2x12x32x128xbf16, #tpu.memory_space<vmem>> -> memref<1x12x32x128xbf16, #tpu.memory_space<vmem>>
    %48 = tpu.memref_squeeze %47 : memref<1x12x32x128xbf16, #tpu.memory_space<vmem>> -> memref<12x32x128xbf16, #tpu.memory_space<vmem>>
    %c4_63 = arith.constant 4 : index
    %c0_64 = arith.constant 0 : index
    %c0_65 = arith.constant 0 : index
    %49 = vector.load %48[%c4_63, %c0_64, %c0_65] : memref<12x32x128xbf16, #tpu.memory_space<vmem>>, vector<8x16x128xbf16>
    %c0_66 = arith.constant 0 : index
    %c0_67 = arith.constant 0 : index
    %c768 = arith.constant 768 : index
    %50 = vector.load %arg8[%c0_66, %c0_67, %c768] : memref<8x16x1152xbf16, #tpu.memory_space<vmem>>, vector<8x16x128xbf16>
    tpu.vector_store %arg8[%c0_66, %c0_67, %c768], %49 {strides = array<i32>} : memref<8x16x1152xbf16, #tpu.memory_space<vmem>>, vector<8x16x128xbf16>,
    %c0_i32_68 = arith.constant 0 : i32
    %c0_i32_69 = arith.constant 0 : i32
    %c0_i32_70 = arith.constant 0 : i32
    %51 = tpu.memref_slice %arg6[%12, %c0_i32_68, %c0_i32_69, %c0_i32_70] : memref<2x12x32x128xbf16, #tpu.memory_space<vmem>> -> memref<1x12x32x128xbf16, #tpu.memory_space<vmem>>
    %52 = tpu.memref_squeeze %51 : memref<1x12x32x128xbf16, #tpu.memory_space<vmem>> -> memref<12x32x128xbf16, #tpu.memory_space<vmem>>
    %c4_71 = arith.constant 4 : index
    %c2_72 = arith.constant 2 : index
    %c0_73 = arith.constant 0 : index
    %53 = vector.load %52[%c4_71, %c2_72, %c0_73] : memref<12x32x128xbf16, #tpu.memory_space<vmem>>, vector<8x16x128xbf16>
    %c0_74 = arith.constant 0 : index
    %c0_75 = arith.constant 0 : index
    %c896 = arith.constant 896 : index
    %54 = vector.load %arg8[%c0_74, %c0_75, %c896] : memref<8x16x1152xbf16, #tpu.memory_space<vmem>>, vector<8x16x128xbf16>
    tpu.vector_store %arg8[%c0_74, %c0_75, %c896], %53 {strides = array<i32>} : memref<8x16x1152xbf16, #tpu.memory_space<vmem>>, vector<8x16x128xbf16>,
    %c0_i32_76 = arith.constant 0 : i32
    %c0_i32_77 = arith.constant 0 : i32
    %c0_i32_78 = arith.constant 0 : i32
    %55 = tpu.memref_slice %arg6[%12, %c0_i32_76, %c0_i32_77, %c0_i32_78] : memref<2x12x32x128xbf16, #tpu.memory_space<vmem>> -> memref<1x12x32x128xbf16, #tpu.memory_space<vmem>>
    %56 = tpu.memref_squeeze %55 : memref<1x12x32x128xbf16, #tpu.memory_space<vmem>> -> memref<12x32x128xbf16, #tpu.memory_space<vmem>>
    %c4_79 = arith.constant 4 : index
    %c4_80 = arith.constant 4 : index
    %c0_81 = arith.constant 0 : index
    %57 = vector.load %56[%c4_79, %c4_80, %c0_81] : memref<12x32x128xbf16, #tpu.memory_space<vmem>>, vector<8x16x128xbf16>
    %c0_82 = arith.constant 0 : index
    %c0_83 = arith.constant 0 : index
    %c1024 = arith.constant 1024 : index
    %58 = vector.load %arg8[%c0_82, %c0_83, %c1024] : memref<8x16x1152xbf16, #tpu.memory_space<vmem>>, vector<8x16x128xbf16>
    tpu.vector_store %arg8[%c0_82, %c0_83, %c1024], %57 {strides = array<i32>} : memref<8x16x1152xbf16, #tpu.memory_space<vmem>>, vector<8x16x128xbf16>,
    %c0_84 = arith.constant 0 : index
    %c0_85 = arith.constant 0 : index
    %c0_86 = arith.constant 0 : index
    %59 = vector.load %arg8[%c0_84, %c0_85, %c0_86] : memref<8x16x1152xbf16, #tpu.memory_space<vmem>>, vector<8x16x1152xbf16>
    %60 = vector.shape_cast %59 : vector<8x16x1152xbf16> to vector<128x1152xbf16>
    %c0_87 = arith.constant 0 : index
    %c0_88 = arith.constant 0 : index
    %61 = vector.load %arg3[%c0_87, %c0_88] : memref<1152x128xbf16, #tpu.memory_space<vmem>>, vector<1152x128xbf16>
    %cst = arith.constant dense<0.000000e+00> : vector<128x128xf32>
    %62 = tpu.matmul %60, %61, %cst {dimension_numbers = #tpu.dot_dimension_numbers<[1], [0], [0], [1], [0, 0, 1, 1], [], []>} : vector<128x1152xbf16>, vector<1152x128xbf16>, vector<128x128xf32> -> vector<128x128xf32>
    %c0_89 = arith.constant 0 : index
    %c0_90 = arith.constant 0 : index
    %63 = vector.load %arg4[%c0_89, %c0_90] : memref<1x128xf32, #tpu.memory_space<vmem>>, vector<1x128xf32>
    %64 = vector.broadcast %63 : vector<1x128xf32> to vector<128x128xf32>
    %65 = arith.addf %62, %64 : vector<128x128xf32>
    %66 = vector.shape_cast %65 : vector<128x128xf32> to vector<8x16x128xf32>
    %c0_91 = arith.constant 0 : index
    %c0_92 = arith.constant 0 : index
    %c0_93 = arith.constant 0 : index
    %c0_94 = arith.constant 0 : index
    %67 = vector.load %arg5[%c0_91, %c0_92, %c0_93, %c0_94] : memref<1x8x16x128xf32, #tpu.memory_space<vmem>>, vector<1x8x16x128xf32>
    %68 = vector.shape_cast %67 : vector<1x8x16x128xf32> to vector<8x16x128xf32>
    %69 = vector.shape_cast %66 : vector<8x16x128xf32> to vector<1x8x16x128xf32>
    tpu.vector_store %arg5[%c0_91, %c0_92, %c0_93, %c0_94], %69 {strides = array<i32>} : memref<1x8x16x128xf32, #tpu.memory_space<vmem>>, vector<1x8x16x128xf32>,
    return
  }
  func.func @transform_1(%arg0: i32, %arg1: i32) -> (i32, i32) {
    %c0_i32 = arith.constant 0 : i32
    %c0_i32_0 = arith.constant 0 : i32
    %c0_i32_1 = arith.constant 0 : i32
    return %c0_i32, %c0_i32_0 : i32, i32
  }
  func.func @transform_2(%arg0: i32, %arg1: i32) -> (i32, i32) {
    %c0_i32 = arith.constant 0 : i32
    %c0_i32_0 = arith.constant 0 : i32
    %c0_i32_1 = arith.constant 0 : i32
    return %c0_i32, %c0_i32_0 : i32, i32
  }
  func.func @transform_3(%arg0: i32, %arg1: i32) -> (i32, i32, i32, i32) {
    %c0_i32 = arith.constant 0 : i32
    %c0_i32_0 = arith.constant 0 : i32
    %c0_i32_1 = arith.constant 0 : i32
    return %arg0, %arg1, %c0_i32, %c0_i32_0 : i32, i32, i32, i32
  }
}

</mosaic_0001>

<llo_original>
// kernel: atrous_conv2d.1
$region0: #{atrous_conv2d.1}
  #allocation0 [shape = 'u32[]', space=smem, size = 0x4, offset = 0x4, fixed_abs, tag = 'smem constant byte address 0x4 - core index']
  #allocation1 [shape = 'u32[72,128]{1,0:T(1,128)}', space=vmem, size = 0x9000, scoped, tag = 'internal scratch']
  #allocation2 [shape = 'bf16[2,12,32,128]{3,2,1,0:T(8,128)(2,1)}', space=vmem, size = 0x30000, scoped, tag = 'scratch operand']
  #allocation3 [shape = 's32[2]{0}', space=sflag, size = 0x8, scoped, tag = 'scratch operand']
  #allocation4 [shape = 'bf16[8,16,1152]{2,1,0:T(8,128)(2,1)}', space=vmem, size = 0x48000, scoped, tag = 'scratch operand']
  #allocation7 [shape = 's32[]', space=sflag, size = 0x4, offset = 0, fixed_abs, tag = 'sflag constant byte address 0x0 - dummy sync flag']
  #allocation8 [shape = 's32[]', space=sflag, size = 0x4, offset = 0, fixed_abs, tag = 'sflag constant byte address 0x0 - dummy sync flag']
  %s0 = inlined_call_operand.vmem [shape: bf16[2,20,32,128], index: 0, kind: input, shape index: {}]
  %s1 = inlined_call_operand.vmem [shape: bf16[1152,128], index: 1, kind: input, shape index: {}]
  %s2 = inlined_call_operand.vmem [shape: f32[1,128], index: 2, kind: input, shape index: {}]
  %s3 = inlined_call_operand.hbm [shape: f32[2,16,16,128], index: 3, kind: output, shape index: {}]
  %s4 = sld [smem:[#allocation0]]
  $region87: #{atrous_conv2d.1} parent=0
    _
  %s6 = ssub.s32 1, %s4
  %s7 = scalar_select 0, %s6, %s4
  $region1: #{atrous_conv2d.1} parent=0
    #allocation5 [shape = 'u8[131072]{0}', space=vmem, size = 0x20000, scoped, tag = 'output window, operand 0']
    #allocation6 [shape = 's32[2]{0}', space=sflag, size = 0x8, scoped, tag = 'scoped memory for atrous_conv2d.1']
    %8 = vsyncpa [#allocation6], 0
    %s9 = scalar_lea.sflag [#allocation6], 1
    %10 = vsyncpa %s9, 0
    loop: start=0, step=1, limit=6
    $region2: #{atrous_conv2d.1} parent=1 // loop_pre_header
      _
    $region3: #{atrous_conv2d.1} parent=1 // loop_header
      %s12 = sphi 0, %s16
      %p13 = scmp.ge.s32.totalorder %s12, 6
      %s19 = sphi 0, %s31
      %s20 = sphi 0, %s27
      %s21 = sphi 0, %s19
      %s22 = sphi 0, %s20
      %s23 = sphi 0, %s21
      %s24 = sphi 0, %s22
      %s32 = sphi 0, %s32
      %s34 = sphi 0, %s32
      %s35 = sphi 0, %s34
      %s49 = sphi 0, %s35
      %s53 = sphi 0, %s53
      %s55 = sphi 0, %s53
      %s56 = sphi 0, %s55
      %s70 = sphi 0, %s56
      %s78 = sphi 0, %s80
      %s81 = sphi 0, %s78
      %s82 = sphi 0, %s81
      %s98 = sphi 0, %s82
    $region4: #{atrous_conv2d.1} parent=1 // loop_header_branch
      %15 = sbr.rel (%p13) target = $region8
    $region5: #{atrous_conv2d.1} parent=1 // loop_body
      %s17 = ssub.s32 %s12, 1
      %s18 = ssub.s32 %s12, 2
      %s25 = sadd.s32 1, %s20
      %p26 = scmp.ge.s32.totalorder %s25, 2
      %s27 = scalar_select %p26, 0, %s25
      %s28 = sadd.s32 1, %s19
      %s29 = scalar_select %p26, %s28, %s19
      %p30 = scmp.ge.s32.totalorder %s29, 2
      %s31 = scalar_select %p30, 0, %s29
      %s33 = sadd.s32 %s32, 1
      %p36 = scmp.eq.s32.totalorder %s12, 3
      %p37 = scmp.ne.s32.totalorder %s32, %s34
      %p38 = scmp.eq.s32.totalorder %s12, 0
      %p39 = por %p37, %p38
      %p40 = scmp.ne.s32.totalorder %s32, %s34
      %p41 = scmp.eq.s32.totalorder %s17, 3
      %p42 = por %p40, %p41
      %p43 = scmp.ne.s32.totalorder %s34, %s35
      %p44 = scmp.eq.s32.totalorder %s17, 0
      %p45 = por %p43, %p44
      %p46 = scmp.ne.s32.totalorder %s34, %s35
      %p47 = scmp.eq.s32.totalorder %s18, 3
      %p48 = por %p46, %p47
      %p50 = scmp.ne.s32.totalorder %s35, %s49
      %p51 = scmp.eq.s32.totalorder %s18, 0
      %p52 = por %p50, %p51
      %s54 = sadd.s32 %s53, 1
      %p57 = scmp.eq.s32.totalorder %s12, 3
      %p58 = scmp.ne.s32.totalorder %s53, %s55
      %p59 = scmp.eq.s32.totalorder %s12, 0
      %p60 = por %p58, %p59
      %p61 = scmp.ne.s32.totalorder %s53, %s55
      %p62 = scmp.eq.s32.totalorder %s17, 3
      %p63 = por %p61, %p62
      %p64 = scmp.ne.s32.totalorder %s55, %s56
      %p65 = scmp.eq.s32.totalorder %s17, 0
      %p66 = por %p64, %p65
      %p67 = scmp.ne.s32.totalorder %s55, %s56
      %p68 = scmp.eq.s32.totalorder %s18, 3
      %p69 = por %p67, %p68
      %p71 = scmp.ne.s32.totalorder %s56, %s70
      %p72 = scmp.eq.s32.totalorder %s18, 0
      %p73 = por %p71, %p72
      %s74 = ssub.s32 %s19, %s31
      %s75 = ssub.s32 %s20, %s27
      %s76 = sor.u32 %s74, %s75
      %p77 = scmp.eq.s32.totalorder %s76, 0
      %s79 = sadd.s32 %s78, 1
      %s80 = scalar_select %p77, %s78, %s79
      %p83 = pneg %p77
      %p84 = scmp.eq.s32.totalorder %s12, 3
      %p85 = por %p83, %p84
      %p86 = scmp.ne.s32.totalorder %s78, %s81
      %p87 = scmp.eq.s32.totalorder %s12, 0
      %p88 = por %p86, %p87
      %p89 = scmp.ne.s32.totalorder %s78, %s81
      %p90 = scmp.eq.s32.totalorder %s17, 3
      %p91 = por %p89, %p90
      %p92 = scmp.ne.s32.totalorder %s81, %s82
      %p93 = scmp.eq.s32.totalorder %s17, 0
      %p94 = por %p92, %p93
      %p95 = scmp.ne.s32.totalorder %s81, %s82
      %p96 = scmp.eq.s32.totalorder %s18, 3
      %p97 = por %p95, %p96
      %p99 = scmp.ne.s32.totalorder %s82, %s98
      %p100 = scmp.eq.s32.totalorder %s18, 0
      %p101 = por %p99, %p100
      %p102 = scmp.le.s32.totalorder 1, %s12
      %p103 = scmp.lt.s32.totalorder %s12, 5
      %p104 = pnand %p102, %p103
      %p105 = pneg %p104
      // Predicated region
      $region9: #{atrous_conv2d.1} parent=5 // pred_check
        _
      $region10: #{atrous_conv2d.1} parent=5 // pred_check_branch
        %107 = sbr.rel (%p104) target = $region12
      $region11: #{atrous_conv2d.1} parent=5 // pred_region
        %s108 = ssub.s32 %s12, 1
        // Predicated region
        $region13: #{atrous_conv2d.1} parent=11 // pred_check
          %p109 = pneg %p45
        $region14: #{atrous_conv2d.1} parent=11 // pred_check_branch
          %111 = sbr.rel (%p109) target = $region16
        $region15: #{atrous_conv2d.1} parent=11 // pred_region
          _
        $region16: #{atrous_conv2d.1} parent=11 // pred_fallthru
          _
        // Predicated region
        $region17: #{atrous_conv2d.1} parent=11 // pred_check
          %p112 = pneg %p66
        $region18: #{atrous_conv2d.1} parent=11 // pred_check_branch
          %114 = sbr.rel (%p112) target = $region20
        $region19: #{atrous_conv2d.1} parent=11 // pred_region
          _
        $region20: #{atrous_conv2d.1} parent=11 // pred_fallthru
          _
      $region12: #{atrous_conv2d.1} parent=5 // pred_fallthru
        _
      %p115 = scmp.lt.s32.totalorder %s12, 4
      // Predicated region
      $region21: #{atrous_conv2d.1} parent=5 // pred_check
        %p116 = pneg %p115
      $region22: #{atrous_conv2d.1} parent=5 // pred_check_branch
        %118 = sbr.rel (%p116) target = $region24
      $region23: #{atrous_conv2d.1} parent=5 // pred_region
        _
      $region24: #{atrous_conv2d.1} parent=5 // pred_fallthru
        _
      %p119 = scmp.le.s32.totalorder 1, %s12
      %p120 = scmp.lt.s32.totalorder %s12, 5
      %p121 = pnand %p119, %p120
      %p122 = pneg %p121
      // Predicated region
      $region25: #{atrous_conv2d.1} parent=5 // pred_check
        _
      $region26: #{atrous_conv2d.1} parent=5 // pred_check_branch
        %124 = sbr.rel (%p121) target = $region28
      $region27: #{atrous_conv2d.1} parent=5 // pred_region
        %s125 = ssub.s32 %s12, 1
        %p126 = pneg %p45
        %p127 = pneg %p42
        %p128 = pneg %p66
        %p129 = pneg %p63
        %p130 = pneg %p94
        %p131 = pneg %p91
        %s132 = sand.u32 %s81, 1
        %s133 = scalar_lea.sflag [#allocation6], %s132
        %s134 = sand.u32 %s81, 1
        %s135 = smul.addr %s134, 128
        %s136 = scalar_lea.vmem [#allocation5], %s135
        %s137 = smul.u32 8, %s22
        %p138 = scmp.eq.s32.totalorder %s22, 0
        // Predicated region
        $region29: #{atrous_conv2d.1} parent=27 // pred_check
          %p139 = pneg %p138
        $region30: #{atrous_conv2d.1} parent=27 // pred_check_branch
          %141 = sbr.rel (%p139) target = $region32
        $region31: #{atrous_conv2d.1} parent=27 // pred_region
          %s142 = smul.u32 %s21, 80
          %s143 = smul.addr %s142, 4
          %s144 = scalar_lea.vmem %s0, %s143
          // Predicated region
          $region33: #{atrous_conv2d.1} parent=31 // pred_check
            _
          $region34: #{atrous_conv2d.1} parent=31 // pred_check_branch
            %146 = sbr.rel (0) target = $region36
          $region35: #{atrous_conv2d.1} parent=31 // pred_region
            loop: start=0, step=1, limit=1
            $region37: #{atrous_conv2d.1} parent=35 // loop_pre_header
              _
            $region38: #{atrous_conv2d.1} parent=35 // loop_header
              %s148 = sphi 0, %s152
              %p149 = scmp.ge.s32.totalorder %s148, 1
              %s153 = sphi %s144, %s144
              %s154 = sphi [#allocation2], [#allocation2]
            $region39: #{atrous_conv2d.1} parent=35 // loop_header_branch
              %151 = sbr.rel (%p149) target = $region43
            $region40: #{atrous_conv2d.1} parent=35 // loop_body
              %v155 = vld [vmem:[%s153] sm:$0xff]
              %156 = vst [vmem:[%s154] sm:$0xff] %v155
              %v157 = vld [vmem:[%s153 + $0x8] sm:$0xff]
              %158 = vst [vmem:[%s154 + $0x8] sm:$0xff] %v157
              %v159 = vld [vmem:[%s153 + $0x10] sm:$0xff]
              %160 = vst [vmem:[%s154 + $0x10] sm:$0xff] %v159
              %v161 = vld [vmem:[%s153 + $0x18] sm:$0xff]
              %162 = vst [vmem:[%s154 + $0x18] sm:$0xff] %v161
              %v163 = vld [vmem:[%s153 + $0x20] sm:$0xff]
              %164 = vst [vmem:[%s154 + $0x20] sm:$0xff] %v163
              %v165 = vld [vmem:[%s153 + $0x28] sm:$0xff]
              %166 = vst [vmem:[%s154 + $0x28] sm:$0xff] %v165
              %v167 = vld [vmem:[%s153 + $0x30] sm:$0xff]
              %168 = vst [vmem:[%s154 + $0x30] sm:$0xff] %v167
              %v169 = vld [vmem:[%s153 + $0x38] sm:$0xff]
              %170 = vst [vmem:[%s154 + $0x38] sm:$0xff] %v169
              %v171 = vld [vmem:[%s153 + $0x40] sm:$0xff]
              %172 = vst [vmem:[%s154 + $0x40] sm:$0xff] %v171
              %v173 = vld [vmem:[%s153 + $0x48] sm:$0xff]
              %174 = vst [vmem:[%s154 + $0x48] sm:$0xff] %v173
              %v175 = vld [vmem:[%s153 + $0x50] sm:$0xff]
              %176 = vst [vmem:[%s154 + $0x50] sm:$0xff] %v175
              %v177 = vld [vmem:[%s153 + $0x58] sm:$0xff]
              %178 = vst [vmem:[%s154 + $0x58] sm:$0xff] %v177
              %v179 = vld [vmem:[%s153 + $0x60] sm:$0xff]
              %180 = vst [vmem:[%s154 + $0x60] sm:$0xff] %v179
              %v181 = vld [vmem:[%s153 + $0x68] sm:$0xff]
              %182 = vst [vmem:[%s154 + $0x68] sm:$0xff] %v181
              %v183 = vld [vmem:[%s153 + $0x70] sm:$0xff]
              %184 = vst [vmem:[%s154 + $0x70] sm:$0xff] %v183
              %v185 = vld [vmem:[%s153 + $0x78] sm:$0xff]
              %186 = vst [vmem:[%s154 + $0x78] sm:$0xff] %v185
              %v187 = vld [vmem:[%s153 + $0x80] sm:$0xff]
              %188 = vst [vmem:[%s154 + $0x80] sm:$0xff] %v187
              %v189 = vld [vmem:[%s153 + $0x88] sm:$0xff]
              %190 = vst [vmem:[%s154 + $0x88] sm:$0xff] %v189
              %v191 = vld [vmem:[%s153 + $0x90] sm:$0xff]
              %192 = vst [vmem:[%s154 + $0x90] sm:$0xff] %v191
              %v193 = vld [vmem:[%s153 + $0x98] sm:$0xff]
              %194 = vst [vmem:[%s154 + $0x98] sm:$0xff] %v193
              %v195 = vld [vmem:[%s153 + $0xa0] sm:$0xff]
              %196 = vst [vmem:[%s154 + $0xa0] sm:$0xff] %v195
              %v197 = vld [vmem:[%s153 + $0xa8] sm:$0xff]
              %198 = vst [vmem:[%s154 + $0xa8] sm:$0xff] %v197
              %v199 = vld [vmem:[%s153 + $0xb0] sm:$0xff]
              %200 = vst [vmem:[%s154 + $0xb0] sm:$0xff] %v199
              %v201 = vld [vmem:[%s153 + $0xb8] sm:$0xff]
              %202 = vst [vmem:[%s154 + $0xb8] sm:$0xff] %v201
            $region41: #{atrous_conv2d.1} parent=35 // loop_footer
              %s152 = sadd.s32 1, %s148
            $region42: #{atrous_conv2d.1} parent=35 // loop_footer_branch
              %147 = sbr.rel target = $region38
            $region43: #{atrous_conv2d.1} parent=35 // loop_exit
              _
          $region36: #{atrous_conv2d.1} parent=31 // pred_fallthru
            _
          // Predicated region
          $region44: #{atrous_conv2d.1} parent=31 // pred_check
            _
          $region45: #{atrous_conv2d.1} parent=31 // pred_check_branch
            %204 = sbr.rel target = $region47
          $region46: #{atrous_conv2d.1} parent=31 // pred_region
            _
          $region47: #{atrous_conv2d.1} parent=31 // pred_fallthru
            _
          // Predicated region
          $region48: #{atrous_conv2d.1} parent=31 // pred_check
            _
          $region49: #{atrous_conv2d.1} parent=31 // pred_check_branch
            %207 = sbr.rel (0) target = $region51
          $region50: #{atrous_conv2d.1} parent=31 // pred_region
            %208 = vsyncadd [#allocation3], 3072
          $region51: #{atrous_conv2d.1} parent=31 // pred_fallthru
            _
        $region32: #{atrous_conv2d.1} parent=27 // pred_fallthru
          _
        %p209 = scmp.lt.s32.totalorder %s22, 0
        %s210 = ssub.s32 0, %s22
        %s211 = scalar_select %p209, %s210, %s22
        %s212 = sand.u32 %s211, 1
        %s213 = ssub.s32 0, %s212
        %s214 = scalar_select %p209, %s213, %s212
        %p215 = scmp.ne.s32.totalorder %s214, 0
        %p216 = scmp.lt.s32.totalorder %s214, 0
        %p217 = pnand %p216, %p215
        %p218 = pneg %p217
        %s219 = sadd.s32 %s214, 2
        %s220 = scalar_select %p218, %s219, %s214
        %s221 = sadd.s32 %s22, 1
        %p222 = scmp.lt.s32.totalorder %s221, 2
        // Predicated region
        $region52: #{atrous_conv2d.1} parent=27 // pred_check
          %p223 = pneg %p222
        $region53: #{atrous_conv2d.1} parent=27 // pred_check_branch
          %225 = sbr.rel (%p223) target = $region55
        $region54: #{atrous_conv2d.1} parent=27 // pred_region
          %s226 = ssub.s32 1, %s220
          %s227 = smul.u32 %s221, 8
          %s228 = smul.u32 %s227, 4
          %s229 = smul.u32 %s21, 80
          %s230 = sadd.s32 %s228, %s229
          %s231 = smul.addr %s230, 4
          %s232 = scalar_lea.vmem %s0, %s231
          %s233 = smul.u32 %s226, 48
          %s234 = smul.addr %s233, 4
          %s235 = scalar_lea.vmem [#allocation2], %s234
          %s236 = scalar_lea.sflag [#allocation3], %s226
          // Predicated region
          $region56: #{atrous_conv2d.1} parent=54 // pred_check
            _
          $region57: #{atrous_conv2d.1} parent=54 // pred_check_branch
            %238 = sbr.rel (0) target = $region59
          $region58: #{atrous_conv2d.1} parent=54 // pred_region
            loop: start=0, step=1, limit=1
            $region60: #{atrous_conv2d.1} parent=58 // loop_pre_header
              _
            $region61: #{atrous_conv2d.1} parent=58 // loop_header
              %s240 = sphi 0, %s244
              %p241 = scmp.ge.s32.totalorder %s240, 1
              %s245 = sphi %s232, %s232
              %s246 = sphi %s235, %s235
            $region62: #{atrous_conv2d.1} parent=58 // loop_header_branch
              %243 = sbr.rel (%p241) target = $region66
            $region63: #{atrous_conv2d.1} parent=58 // loop_body
              %v247 = vld [vmem:[%s245] sm:$0xff]
              %248 = vst [vmem:[%s246] sm:$0xff] %v247
              %v249 = vld [vmem:[%s245 + $0x8] sm:$0xff]
              %250 = vst [vmem:[%s246 + $0x8] sm:$0xff] %v249
              %v251 = vld [vmem:[%s245 + $0x10] sm:$0xff]
              %252 = vst [vmem:[%s246 + $0x10] sm:$0xff] %v251
              %v253 = vld [vmem:[%s245 + $0x18] sm:$0xff]
              %254 = vst [vmem:[%s246 + $0x18] sm:$0xff] %v253
              %v255 = vld [vmem:[%s245 + $0x20] sm:$0xff]
              %256 = vst [vmem:[%s246 + $0x20] sm:$0xff] %v255
              %v257 = vld [vmem:[%s245 + $0x28] sm:$0xff]
              %258 = vst [vmem:[%s246 + $0x28] sm:$0xff] %v257
              %v259 = vld [vmem:[%s245 + $0x30] sm:$0xff]
              %260 = vst [vmem:[%s246 + $0x30] sm:$0xff] %v259
              %v261 = vld [vmem:[%s245 + $0x38] sm:$0xff]
              %262 = vst [vmem:[%s246 + $0x38] sm:$0xff] %v261
              %v263 = vld [vmem:[%s245 + $0x40] sm:$0xff]
              %264 = vst [vmem:[%s246 + $0x40] sm:$0xff] %v263
              %v265 = vld [vmem:[%s245 + $0x48] sm:$0xff]
              %266 = vst [vmem:[%s246 + $0x48] sm:$0xff] %v265
              %v267 = vld [vmem:[%s245 + $0x50] sm:$0xff]
              %268 = vst [vmem:[%s246 + $0x50] sm:$0xff] %v267
              %v269 = vld [vmem:[%s245 + $0x58] sm:$0xff]
              %270 = vst [vmem:[%s246 + $0x58] sm:$0xff] %v269
              %v271 = vld [vmem:[%s245 + $0x60] sm:$0xff]
              %272 = vst [vmem:[%s246 + $0x60] sm:$0xff] %v271
              %v273 = vld [vmem:[%s245 + $0x68] sm:$0xff]
              %274 = vst [vmem:[%s246 + $0x68] sm:$0xff] %v273
              %v275 = vld [vmem:[%s245 + $0x70] sm:$0xff]
              %276 = vst [vmem:[%s246 + $0x70] sm:$0xff] %v275
              %v277 = vld [vmem:[%s245 + $0x78] sm:$0xff]
              %278 = vst [vmem:[%s246 + $0x78] sm:$0xff] %v277
              %v279 = vld [vmem:[%s245 + $0x80] sm:$0xff]
              %280 = vst [vmem:[%s246 + $0x80] sm:$0xff] %v279
              %v281 = vld [vmem:[%s245 + $0x88] sm:$0xff]
              %282 = vst [vmem:[%s246 + $0x88] sm:$0xff] %v281
              %v283 = vld [vmem:[%s245 + $0x90] sm:$0xff]
              %284 = vst [vmem:[%s246 + $0x90] sm:$0xff] %v283
              %v285 = vld [vmem:[%s245 + $0x98] sm:$0xff]
              %286 = vst [vmem:[%s246 + $0x98] sm:$0xff] %v285
              %v287 = vld [vmem:[%s245 + $0xa0] sm:$0xff]
              %288 = vst [vmem:[%s246 + $0xa0] sm:$0xff] %v287
              %v289 = vld [vmem:[%s245 + $0xa8] sm:$0xff]
              %290 = vst [vmem:[%s246 + $0xa8] sm:$0xff] %v289
              %v291 = vld [vmem:[%s245 + $0xb0] sm:$0xff]
              %292 = vst [vmem:[%s246 + $0xb0] sm:$0xff] %v291
              %v293 = vld [vmem:[%s245 + $0xb8] sm:$0xff]
              %294 = vst [vmem:[%s246 + $0xb8] sm:$0xff] %v293
            $region64: #{atrous_conv2d.1} parent=58 // loop_footer
              %s244 = sadd.s32 1, %s240
            $region65: #{atrous_conv2d.1} parent=58 // loop_footer_branch
              %239 = sbr.rel target = $region61
            $region66: #{atrous_conv2d.1} parent=58 // loop_exit
              _
          $region59: #{atrous_conv2d.1} parent=54 // pred_fallthru
            _
          // Predicated region
          $region67: #{atrous_conv2d.1} parent=54 // pred_check
            _
          $region68: #{atrous_conv2d.1} parent=54 // pred_check_branch
            %296 = sbr.rel target = $region70
          $region69: #{atrous_conv2d.1} parent=54 // pred_region
            _
          $region70: #{atrous_conv2d.1} parent=54 // pred_fallthru
            _
          // Predicated region
          $region71: #{atrous_conv2d.1} parent=54 // pred_check
            _
          $region72: #{atrous_conv2d.1} parent=54 // pred_check_branch
            %299 = sbr.rel (0) target = $region74
          $region73: #{atrous_conv2d.1} parent=54 // pred_region
            %300 = vsyncadd %s236, 3072
          $region74: #{atrous_conv2d.1} parent=54 // pred_fallthru
            _
        $region55: #{atrous_conv2d.1} parent=27 // pred_fallthru
          _
        %s301 = smul.u32 %s220, 48
        %s302 = smul.addr %s301, 4
        %s303 = scalar_lea.vmem [#allocation2], %s302
        %s304 = scalar_lea.sflag [#allocation3], %s220
        %s305 = smul.u32 4, 12
        %s306 = smul.u32 %s305, 4
        %s307 = smul.u32 %s306, 1
        %s308 = sshll.u32 %s307, 4
        %309 = dma.done %s304, %s308
        %v310 = vld [vmem:[%s303] sm:$0xf]
        %v311 = vld [vmem:[%s303 + $0x4] sm:$0xf]
        %v312 = vld [vmem:[%s303 + $0x10] sm:$0xf]
        %v313 = vld [vmem:[%s303 + $0x14] sm:$0xf]
        %v314 = vld [vmem:[%s303 + $0x20] sm:$0xf]
        %v315 = vld [vmem:[%s303 + $0x24] sm:$0xf]
        %v316 = vld [vmem:[%s303 + $0x30] sm:$0xf]
        %v317 = vld [vmem:[%s303 + $0x34] sm:$0xf]
        %v318 = vld [vmem:[%s303 + $0x40] sm:$0xf]
        %v319 = vld [vmem:[%s303 + $0x44] sm:$0xf]
        %v320 = vld [vmem:[%s303 + $0x50] sm:$0xf]
        %v321 = vld [vmem:[%s303 + $0x54] sm:$0xf]
        %v322 = vld [vmem:[%s303 + $0x60] sm:$0xf]
        %v323 = vld [vmem:[%s303 + $0x64] sm:$0xf]
        %v324 = vld [vmem:[%s303 + $0x70] sm:$0xf]
        %v325 = vld [vmem:[%s303 + $0x74] sm:$0xf]
        %326 = vst [vmem:[#allocation4] sm:$0xf] %v310
        %327 = vst [vmem:[#allocation4 + $0x24] sm:$0xf] %v311
        %328 = vst [vmem:[#allocation4 + $0x48] sm:$0xf] %v312
        %329 = vst [vmem:[#allocation4 + $0x6c] sm:$0xf] %v313
        %330 = vst [vmem:[#allocation4 + $0x90] sm:$0xf] %v314
        %331 = vst [vmem:[#allocation4 + $0xb4] sm:$0xf] %v315
        %332 = vst [vmem:[#allocation4 + $0xd8] sm:$0xf] %v316
        %333 = vst [vmem:[#allocation4 + $0xfc] sm:$0xf] %v317
        %334 = vst [vmem:[#allocation4 + $0x120] sm:$0xf] %v318
        %335 = vst [vmem:[#allocation4 + $0x144] sm:$0xf] %v319
        %336 = vst [vmem:[#allocation4 + $0x168] sm:$0xf] %v320
        %337 = vst [vmem:[#allocation4 + $0x18c] sm:$0xf] %v321
        %338 = vst [vmem:[#allocation4 + $0x1b0] sm:$0xf] %v322
        %339 = vst [vmem:[#allocation4 + $0x1d4] sm:$0xf] %v323
        %340 = vst [vmem:[#allocation4 + $0x1f8] sm:$0xf] %v324
        %341 = vst [vmem:[#allocation4 + $0x21c] sm:$0xf] %v325
        %v342 = vld [vmem:[%s303] sm:$0xe]
        %v343 = vld [vmem:[%s303 + $0x4] sm:$0xf]
        %v344 = vld [vmem:[%s303 + $0x8] sm:$0x1]
        %v345 = vld [vmem:[%s303 + $0x10] sm:$0xe]
        %v346 = vld [vmem:[%s303 + $0x14] sm:$0xf]
        %v347 = vld [vmem:[%s303 + $0x18] sm:$0x1]
        %v348 = vld [vmem:[%s303 + $0x20] sm:$0xe]
        %v349 = vld [vmem:[%s303 + $0x24] sm:$0xf]
        %v350 = vld [vmem:[%s303 + $0x28] sm:$0x1]
        %v351 = vld [vmem:[%s303 + $0x30] sm:$0xe]
        %v352 = vld [vmem:[%s303 + $0x34] sm:$0xf]
        %v353 = vld [vmem:[%s303 + $0x38] sm:$0x1]
        %v354 = vld [vmem:[%s303 + $0x40] sm:$0xe]
        %v355 = vld [vmem:[%s303 + $0x44] sm:$0xf]
        %v356 = vld [vmem:[%s303 + $0x48] sm:$0x1]
        %v357 = vld [vmem:[%s303 + $0x50] sm:$0xe]
        %v358 = vld [vmem:[%s303 + $0x54] sm:$0xf]
        %v359 = vld [vmem:[%s303 + $0x58] sm:$0x1]
        %v360 = vld [vmem:[%s303 + $0x60] sm:$0xe]
        %v361 = vld [vmem:[%s303 + $0x64] sm:$0xf]
        %v362 = vld [vmem:[%s303 + $0x68] sm:$0x1]
        %v363 = vld [vmem:[%s303 + $0x70] sm:$0xe]
        %v364 = vld [vmem:[%s303 + $0x74] sm:$0xf]
        %v365 = vld [vmem:[%s303 + $0x78] sm:$0x1]
        %vm390 = vcmask 1042432
        %vm391 = vcmask 1046532
        %vm392 = vmor %vm390, %vm391
        %v393 = vrot.slane %v342, 5
        %v394 = vrot.slane %v393, 4
        %v395 = vrot.slane %v343, 5
        %v396 = vsel %vm392, %v394, %v395
        %v397 = vrot.slane %v395, 4
        %v398 = vrot.slane %v344, 5
        %v399 = vsel %vm392, %v397, %v398
        %v400 = vrot.slane %v345, 5
        %v401 = vrot.slane %v400, 4
        %v402 = vrot.slane %v346, 5
        %v403 = vsel %vm392, %v401, %v402
        %v404 = vrot.slane %v402, 4
        %v405 = vrot.slane %v347, 5
        %v406 = vsel %vm392, %v404, %v405
        %v407 = vrot.slane %v348, 5
        %v408 = vrot.slane %v407, 4
        %v409 = vrot.slane %v349, 5
        %v410 = vsel %vm392, %v408, %v409
        %v411 = vrot.slane %v409, 4
        %v412 = vrot.slane %v350, 5
        %v413 = vsel %vm392, %v411, %v412
        %v414 = vrot.slane %v351, 5
        %v415 = vrot.slane %v414, 4
        %v416 = vrot.slane %v352, 5
        %v417 = vsel %vm392, %v415, %v416
        %v418 = vrot.slane %v416, 4
        %v419 = vrot.slane %v353, 5
        %v420 = vsel %vm392, %v418, %v419
        %v421 = vrot.slane %v354, 5
        %v422 = vrot.slane %v421, 4
        %v423 = vrot.slane %v355, 5
        %v424 = vsel %vm392, %v422, %v423
        %v425 = vrot.slane %v423, 4
        %v426 = vrot.slane %v356, 5
        %v427 = vsel %vm392, %v425, %v426
        %v428 = vrot.slane %v357, 5
        %v429 = vrot.slane %v428, 4
        %v430 = vrot.slane %v358, 5
        %v431 = vsel %vm392, %v429, %v430
        %v432 = vrot.slane %v430, 4
        %v433 = vrot.slane %v359, 5
        %v434 = vsel %vm392, %v432, %v433
        %v435 = vrot.slane %v360, 5
        %v436 = vrot.slane %v435, 4
        %v437 = vrot.slane %v361, 5
        %v438 = vsel %vm392, %v436, %v437
        %v439 = vrot.slane %v437, 4
        %v440 = vrot.slane %v362, 5
        %v441 = vsel %vm392, %v439, %v440
        %v442 = vrot.slane %v363, 5
        %v443 = vrot.slane %v442, 4
        %v444 = vrot.slane %v364, 5
        %v445 = vsel %vm392, %v443, %v444
        %v446 = vrot.slane %v444, 4
        %v447 = vrot.slane %v365, 5
        %v448 = vsel %vm392, %v446, %v447
        %465 = vst [vmem:[#allocation4 + $0x4] sm:$0xf] %v396
        %466 = vst [vmem:[#allocation4 + $0x28] sm:$0xf] %v399
        %467 = vst [vmem:[#allocation4 + $0x4c] sm:$0xf] %v403
        %468 = vst [vmem:[#allocation4 + $0x70] sm:$0xf] %v406
        %469 = vst [vmem:[#allocation4 + $0x94] sm:$0xf] %v410
        %470 = vst [vmem:[#allocation4 + $0xb8] sm:$0xf] %v413
        %471 = vst [vmem:[#allocation4 + $0xdc] sm:$0xf] %v417
        %472 = vst [vmem:[#allocation4 + $0x100] sm:$0xf] %v420
        %473 = vst [vmem:[#allocation4 + $0x124] sm:$0xf] %v424
        %474 = vst [vmem:[#allocation4 + $0x148] sm:$0xf] %v427
        %475 = vst [vmem:[#allocation4 + $0x16c] sm:$0xf] %v431
        %476 = vst [vmem:[#allocation4 + $0x190] sm:$0xf] %v434
        %477 = vst [vmem:[#allocation4 + $0x1b4] sm:$0xf] %v438
        %478 = vst [vmem:[#allocation4 + $0x1d8] sm:$0xf] %v441
        %479 = vst [vmem:[#allocation4 + $0x1fc] sm:$0xf] %v445
        %480 = vst [vmem:[#allocation4 + $0x220] sm:$0xf] %v448
        %v481 = vld [vmem:[%s303] sm:$0xc]
        %v482 = vld [vmem:[%s303 + $0x4] sm:$0xf]
        %v483 = vld [vmem:[%s303 + $0x8] sm:$0x3]
        %v484 = vld [vmem:[%s303 + $0x10] sm:$0xc]
        %v485 = vld [vmem:[%s303 + $0x14] sm:$0xf]
        %v486 = vld [vmem:[%s303 + $0x18] sm:$0x3]
        %v487 = vld [vmem:[%s303 + $0x20] sm:$0xc]
        %v488 = vld [vmem:[%s303 + $0x24] sm:$0xf]
        %v489 = vld [vmem:[%s303 + $0x28] sm:$0x3]
        %v490 = vld [vmem:[%s303 + $0x30] sm:$0xc]
        %v491 = vld [vmem:[%s303 + $0x34] sm:$0xf]
        %v492 = vld [vmem:[%s303 + $0x38] sm:$0x3]
        %v493 = vld [vmem:[%s303 + $0x40] sm:$0xc]
        %v494 = vld [vmem:[%s303 + $0x44] sm:$0xf]
        %v495 = vld [vmem:[%s303 + $0x48] sm:$0x3]
        %v496 = vld [vmem:[%s303 + $0x50] sm:$0xc]
        %v497 = vld [vmem:[%s303 + $0x54] sm:$0xf]
        %v498 = vld [vmem:[%s303 + $0x58] sm:$0x3]
        %v499 = vld [vmem:[%s303 + $0x60] sm:$0xc]
        %v500 = vld [vmem:[%s303 + $0x64] sm:$0xf]
        %v501 = vld [vmem:[%s303 + $0x68] sm:$0x3]
        %v502 = vld [vmem:[%s303 + $0x70] sm:$0xc]
        %v503 = vld [vmem:[%s303 + $0x74] sm:$0xf]
        %v504 = vld [vmem:[%s303 + $0x78] sm:$0x3]
        %vm529 = vcmask 1041408
        %vm530 = vcmask 1045508
        %vm531 = vmor %vm529, %vm530
        %v532 = vrot.slane %v481, 6
        %v533 = vrot.slane %v532, 4
        %v534 = vrot.slane %v482, 6
        %v535 = vsel %vm531, %v533, %v534
        %v536 = vrot.slane %v534, 4
        %v537 = vrot.slane %v483, 6
        %v538 = vsel %vm531, %v536, %v537
        %v539 = vrot.slane %v484, 6
        %v540 = vrot.slane %v539, 4
        %v541 = vrot.slane %v485, 6
        %v542 = vsel %vm531, %v540, %v541
        %v543 = vrot.slane %v541, 4
        %v544 = vrot.slane %v486, 6
        %v545 = vsel %vm531, %v543, %v544
        %v546 = vrot.slane %v487, 6
        %v547 = vrot.slane %v546, 4
        %v548 = vrot.slane %v488, 6
        %v549 = vsel %vm531, %v547, %v548
        %v550 = vrot.slane %v548, 4
        %v551 = vrot.slane %v489, 6
        %v552 = vsel %vm531, %v550, %v551
        %v553 = vrot.slane %v490, 6
        %v554 = vrot.slane %v553, 4
        %v555 = vrot.slane %v491, 6
        %v556 = vsel %vm531, %v554, %v555
        %v557 = vrot.slane %v555, 4
        %v558 = vrot.slane %v492, 6
        %v559 = vsel %vm531, %v557, %v558
        %v560 = vrot.slane %v493, 6
        %v561 = vrot.slane %v560, 4
        %v562 = vrot.slane %v494, 6
        %v563 = vsel %vm531, %v561, %v562
        %v564 = vrot.slane %v562, 4
        %v565 = vrot.slane %v495, 6
        %v566 = vsel %vm531, %v564, %v565
        %v567 = vrot.slane %v496, 6
        %v568 = vrot.slane %v567, 4
        %v569 = vrot.slane %v497, 6
        %v570 = vsel %vm531, %v568, %v569
        %v571 = vrot.slane %v569, 4
        %v572 = vrot.slane %v498, 6
        %v573 = vsel %vm531, %v571, %v572
        %v574 = vrot.slane %v499, 6
        %v575 = vrot.slane %v574, 4
        %v576 = vrot.slane %v500, 6
        %v577 = vsel %vm531, %v575, %v576
        %v578 = vrot.slane %v576, 4
        %v579 = vrot.slane %v501, 6
        %v580 = vsel %vm531, %v578, %v579
        %v581 = vrot.slane %v502, 6
        %v582 = vrot.slane %v581, 4
        %v583 = vrot.slane %v503, 6
        %v584 = vsel %vm531, %v582, %v583
        %v585 = vrot.slane %v583, 4
        %v586 = vrot.slane %v504, 6
        %v587 = vsel %vm531, %v585, %v586
        %604 = vst [vmem:[#allocation4 + $0x8] sm:$0xf] %v535
        %605 = vst [vmem:[#allocation4 + $0x2c] sm:$0xf] %v538
        %606 = vst [vmem:[#allocation4 + $0x50] sm:$0xf] %v542
        %607 = vst [vmem:[#allocation4 + $0x74] sm:$0xf] %v545
        %608 = vst [vmem:[#allocation4 + $0x98] sm:$0xf] %v549
        %609 = vst [vmem:[#allocation4 + $0xbc] sm:$0xf] %v552
        %610 = vst [vmem:[#allocation4 + $0xe0] sm:$0xf] %v556
        %611 = vst [vmem:[#allocation4 + $0x104] sm:$0xf] %v559
        %612 = vst [vmem:[#allocation4 + $0x128] sm:$0xf] %v563
        %613 = vst [vmem:[#allocation4 + $0x14c] sm:$0xf] %v566
        %614 = vst [vmem:[#allocation4 + $0x170] sm:$0xf] %v570
        %615 = vst [vmem:[#allocation4 + $0x194] sm:$0xf] %v573
        %616 = vst [vmem:[#allocation4 + $0x1b8] sm:$0xf] %v577
        %617 = vst [vmem:[#allocation4 + $0x1dc] sm:$0xf] %v580
        %618 = vst [vmem:[#allocation4 + $0x200] sm:$0xf] %v584
        %619 = vst [vmem:[#allocation4 + $0x224] sm:$0xf] %v587
        %s620 = scalar_lea.vmem %s303, 32 [#allocation2]
        %v621 = vld [vmem:[%s620] sm:$0xf]
        %v622 = vld [vmem:[%s620 + $0x4] sm:$0xf]
        %v623 = vld [vmem:[%s620 + $0x10] sm:$0xf]
        %v624 = vld [vmem:[%s620 + $0x14] sm:$0xf]
        %v625 = vld [vmem:[%s620 + $0x20] sm:$0xf]
        %v626 = vld [vmem:[%s620 + $0x24] sm:$0xf]
        %v627 = vld [vmem:[%s620 + $0x30] sm:$0xf]
        %v628 = vld [vmem:[%s620 + $0x34] sm:$0xf]
        %v629 = vld [vmem:[%s620 + $0x40] sm:$0xf]
        %v630 = vld [vmem:[%s620 + $0x44] sm:$0xf]
        %v631 = vld [vmem:[%s620 + $0x50] sm:$0xf]
        %v632 = vld [vmem:[%s620 + $0x54] sm:$0xf]
        %v633 = vld [vmem:[%s620 + $0x60] sm:$0xf]
        %v634 = vld [vmem:[%s620 + $0x64] sm:$0xf]
        %v635 = vld [vmem:[%s620 + $0x70] sm:$0xf]
        %v636 = vld [vmem:[%s620 + $0x74] sm:$0xf]
        %637 = vst [vmem:[#allocation4 + $0xc] sm:$0xf] %v621
        %638 = vst [vmem:[#allocation4 + $0x30] sm:$0xf] %v622
        %639 = vst [vmem:[#allocation4 + $0x54] sm:$0xf] %v623
        %640 = vst [vmem:[#allocation4 + $0x78] sm:$0xf] %v624
        %641 = vst [vmem:[#allocation4 + $0x9c] sm:$0xf] %v625
        %642 = vst [vmem:[#allocation4 + $0xc0] sm:$0xf] %v626
        %643 = vst [vmem:[#allocation4 + $0xe4] sm:$0xf] %v627
        %644 = vst [vmem:[#allocation4 + $0x108] sm:$0xf] %v628
        %645 = vst [vmem:[#allocation4 + $0x12c] sm:$0xf] %v629
        %646 = vst [vmem:[#allocation4 + $0x150] sm:$0xf] %v630
        %647 = vst [vmem:[#allocation4 + $0x174] sm:$0xf] %v631
        %648 = vst [vmem:[#allocation4 + $0x198] sm:$0xf] %v632
        %649 = vst [vmem:[#allocation4 + $0x1bc] sm:$0xf] %v633
        %650 = vst [vmem:[#allocation4 + $0x1e0] sm:$0xf] %v634
        %651 = vst [vmem:[#allocation4 + $0x204] sm:$0xf] %v635
        %652 = vst [vmem:[#allocation4 + $0x228] sm:$0xf] %v636
        %v653 = vld [vmem:[%s620] sm:$0xe]
        %v654 = vld [vmem:[%s620 + $0x4] sm:$0xf]
        %v655 = vld [vmem:[%s620 + $0x8] sm:$0x1]
        %v656 = vld [vmem:[%s620 + $0x10] sm:$0xe]
        %v657 = vld [vmem:[%s620 + $0x14] sm:$0xf]
        %v658 = vld [vmem:[%s620 + $0x18] sm:$0x1]
        %v659 = vld [vmem:[%s620 + $0x20] sm:$0xe]
        %v660 = vld [vmem:[%s620 + $0x24] sm:$0xf]
        %v661 = vld [vmem:[%s620 + $0x28] sm:$0x1]
        %v662 = vld [vmem:[%s620 + $0x30] sm:$0xe]
        %v663 = vld [vmem:[%s620 + $0x34] sm:$0xf]
        %v664 = vld [vmem:[%s620 + $0x38] sm:$0x1]
        %v665 = vld [vmem:[%s620 + $0x40] sm:$0xe]
        %v666 = vld [vmem:[%s620 + $0x44] sm:$0xf]
        %v667 = vld [vmem:[%s620 + $0x48] sm:$0x1]
        %v668 = vld [vmem:[%s620 + $0x50] sm:$0xe]
        %v669 = vld [vmem:[%s620 + $0x54] sm:$0xf]
        %v670 = vld [vmem:[%s620 + $0x58] sm:$0x1]
        %v671 = vld [vmem:[%s620 + $0x60] sm:$0xe]
        %v672 = vld [vmem:[%s620 + $0x64] sm:$0xf]
        %v673 = vld [vmem:[%s620 + $0x68] sm:$0x1]
        %v674 = vld [vmem:[%s620 + $0x70] sm:$0xe]
        %v675 = vld [vmem:[%s620 + $0x74] sm:$0xf]
        %v676 = vld [vmem:[%s620 + $0x78] sm:$0x1]
        %v701 = vrot.slane %v653, 5
        %v702 = vrot.slane %v701, 4
        %v703 = vrot.slane %v654, 5
        %v704 = vsel %vm392, %v702, %v703
        %v705 = vrot.slane %v703, 4
        %v706 = vrot.slane %v655, 5
        %v707 = vsel %vm392, %v705, %v706
        %v708 = vrot.slane %v656, 5
        %v709 = vrot.slane %v708, 4
        %v710 = vrot.slane %v657, 5
        %v711 = vsel %vm392, %v709, %v710
        %v712 = vrot.slane %v710, 4
        %v713 = vrot.slane %v658, 5
        %v714 = vsel %vm392, %v712, %v713
        %v715 = vrot.slane %v659, 5
        %v716 = vrot.slane %v715, 4
        %v717 = vrot.slane %v660, 5
        %v718 = vsel %vm392, %v716, %v717
        %v719 = vrot.slane %v717, 4
        %v720 = vrot.slane %v661, 5
        %v721 = vsel %vm392, %v719, %v720
        %v722 = vrot.slane %v662, 5
        %v723 = vrot.slane %v722, 4
        %v724 = vrot.slane %v663, 5
        %v725 = vsel %vm392, %v723, %v724
        %v726 = vrot.slane %v724, 4
        %v727 = vrot.slane %v664, 5
        %v728 = vsel %vm392, %v726, %v727
        %v729 = vrot.slane %v665, 5
        %v730 = vrot.slane %v729, 4
        %v731 = vrot.slane %v666, 5
        %v732 = vsel %vm392, %v730, %v731
        %v733 = vrot.slane %v731, 4
        %v734 = vrot.slane %v667, 5
        %v735 = vsel %vm392, %v733, %v734
        %v736 = vrot.slane %v668, 5
        %v737 = vrot.slane %v736, 4
        %v738 = vrot.slane %v669, 5
        %v739 = vsel %vm392, %v737, %v738
        %v740 = vrot.slane %v738, 4
        %v741 = vrot.slane %v670, 5
        %v742 = vsel %vm392, %v740, %v741
        %v743 = vrot.slane %v671, 5
        %v744 = vrot.slane %v743, 4
        %v745 = vrot.slane %v672, 5
        %v746 = vsel %vm392, %v744, %v745
        %v747 = vrot.slane %v745, 4
        %v748 = vrot.slane %v673, 5
        %v749 = vsel %vm392, %v747, %v748
        %v750 = vrot.slane %v674, 5
        %v751 = vrot.slane %v750, 4
        %v752 = vrot.slane %v675, 5
        %v753 = vsel %vm392, %v751, %v752
        %v754 = vrot.slane %v752, 4
        %v755 = vrot.slane %v676, 5
        %v756 = vsel %vm392, %v754, %v755
        %773 = vst [vmem:[#allocation4 + $0x10] sm:$0xf] %v704
        %774 = vst [vmem:[#allocation4 + $0x34] sm:$0xf] %v707
        %775 = vst [vmem:[#allocation4 + $0x58] sm:$0xf] %v711
        %776 = vst [vmem:[#allocation4 + $0x7c] sm:$0xf] %v714
        %777 = vst [vmem:[#allocation4 + $0xa0] sm:$0xf] %v718
        %778 = vst [vmem:[#allocation4 + $0xc4] sm:$0xf] %v721
        %779 = vst [vmem:[#allocation4 + $0xe8] sm:$0xf] %v725
        %780 = vst [vmem:[#allocation4 + $0x10c] sm:$0xf] %v728
        %781 = vst [vmem:[#allocation4 + $0x130] sm:$0xf] %v732
        %782 = vst [vmem:[#allocation4 + $0x154] sm:$0xf] %v735
        %783 = vst [vmem:[#allocation4 + $0x178] sm:$0xf] %v739
        %784 = vst [vmem:[#allocation4 + $0x19c] sm:$0xf] %v742
        %785 = vst [vmem:[#allocation4 + $0x1c0] sm:$0xf] %v746
        %786 = vst [vmem:[#allocation4 + $0x1e4] sm:$0xf] %v749
        %787 = vst [vmem:[#allocation4 + $0x208] sm:$0xf] %v753
        %788 = vst [vmem:[#allocation4 + $0x22c] sm:$0xf] %v756
        %v789 = vld [vmem:[%s620] sm:$0xc]
        %v790 = vld [vmem:[%s620 + $0x4] sm:$0xf]
        %v791 = vld [vmem:[%s620 + $0x8] sm:$0x3]
        %v792 = vld [vmem:[%s620 + $0x10] sm:$0xc]
        %v793 = vld [vmem:[%s620 + $0x14] sm:$0xf]
        %v794 = vld [vmem:[%s620 + $0x18] sm:$0x3]
        %v795 = vld [vmem:[%s620 + $0x20] sm:$0xc]
        %v796 = vld [vmem:[%s620 + $0x24] sm:$0xf]
        %v797 = vld [vmem:[%s620 + $0x28] sm:$0x3]
        %v798 = vld [vmem:[%s620 + $0x30] sm:$0xc]
        %v799 = vld [vmem:[%s620 + $0x34] sm:$0xf]
        %v800 = vld [vmem:[%s620 + $0x38] sm:$0x3]
        %v801 = vld [vmem:[%s620 + $0x40] sm:$0xc]
        %v802 = vld [vmem:[%s620 + $0x44] sm:$0xf]
        %v803 = vld [vmem:[%s620 + $0x48] sm:$0x3]
        %v804 = vld [vmem:[%s620 + $0x50] sm:$0xc]
        %v805 = vld [vmem:[%s620 + $0x54] sm:$0xf]
        %v806 = vld [vmem:[%s620 + $0x58] sm:$0x3]
        %v807 = vld [vmem:[%s620 + $0x60] sm:$0xc]
        %v808 = vld [vmem:[%s620 + $0x64] sm:$0xf]
        %v809 = vld [vmem:[%s620 + $0x68] sm:$0x3]
        %v810 = vld [vmem:[%s620 + $0x70] sm:$0xc]
        %v811 = vld [vmem:[%s620 + $0x74] sm:$0xf]
        %v812 = vld [vmem:[%s620 + $0x78] sm:$0x3]
        %v837 = vrot.slane %v789, 6
        %v838 = vrot.slane %v837, 4
        %v839 = vrot.slane %v790, 6
        %v840 = vsel %vm531, %v838, %v839
        %v841 = vrot.slane %v839, 4
        %v842 = vrot.slane %v791, 6
        %v843 = vsel %vm531, %v841, %v842
        %v844 = vrot.slane %v792, 6
        %v845 = vrot.slane %v844, 4
        %v846 = vrot.slane %v793, 6
        %v847 = vsel %vm531, %v845, %v846
        %v848 = vrot.slane %v846, 4
        %v849 = vrot.slane %v794, 6
        %v850 = vsel %vm531, %v848, %v849
        %v851 = vrot.slane %v795, 6
        %v852 = vrot.slane %v851, 4
        %v853 = vrot.slane %v796, 6
        %v854 = vsel %vm531, %v852, %v853
        %v855 = vrot.slane %v853, 4
        %v856 = vrot.slane %v797, 6
        %v857 = vsel %vm531, %v855, %v856
        %v858 = vrot.slane %v798, 6
        %v859 = vrot.slane %v858, 4
        %v860 = vrot.slane %v799, 6
        %v861 = vsel %vm531, %v859, %v860
        %v862 = vrot.slane %v860, 4
        %v863 = vrot.slane %v800, 6
        %v864 = vsel %vm531, %v862, %v863
        %v865 = vrot.slane %v801, 6
        %v866 = vrot.slane %v865, 4
        %v867 = vrot.slane %v802, 6
        %v868 = vsel %vm531, %v866, %v867
        %v869 = vrot.slane %v867, 4
        %v870 = vrot.slane %v803, 6
        %v871 = vsel %vm531, %v869, %v870
        %v872 = vrot.slane %v804, 6
        %v873 = vrot.slane %v872, 4
        %v874 = vrot.slane %v805, 6
        %v875 = vsel %vm531, %v873, %v874
        %v876 = vrot.slane %v874, 4
        %v877 = vrot.slane %v806, 6
        %v878 = vsel %vm531, %v876, %v877
        %v879 = vrot.slane %v807, 6
        %v880 = vrot.slane %v879, 4
        %v881 = vrot.slane %v808, 6
        %v882 = vsel %vm531, %v880, %v881
        %v883 = vrot.slane %v881, 4
        %v884 = vrot.slane %v809, 6
        %v885 = vsel %vm531, %v883, %v884
        %v886 = vrot.slane %v810, 6
        %v887 = vrot.slane %v886, 4
        %v888 = vrot.slane %v811, 6
        %v889 = vsel %vm531, %v887, %v888
        %v890 = vrot.slane %v888, 4
        %v891 = vrot.slane %v812, 6
        %v892 = vsel %vm531, %v890, %v891
        %909 = vst [vmem:[#allocation4 + $0x14] sm:$0xf] %v840
        %910 = vst [vmem:[#allocation4 + $0x38] sm:$0xf] %v843
        %911 = vst [vmem:[#allocation4 + $0x5c] sm:$0xf] %v847
        %912 = vst [vmem:[#allocation4 + $0x80] sm:$0xf] %v850
        %913 = vst [vmem:[#allocation4 + $0xa4] sm:$0xf] %v854
        %914 = vst [vmem:[#allocation4 + $0xc8] sm:$0xf] %v857
        %915 = vst [vmem:[#allocation4 + $0xec] sm:$0xf] %v861
        %916 = vst [vmem:[#allocation4 + $0x110] sm:$0xf] %v864
        %917 = vst [vmem:[#allocation4 + $0x134] sm:$0xf] %v868
        %918 = vst [vmem:[#allocation4 + $0x158] sm:$0xf] %v871
        %919 = vst [vmem:[#allocation4 + $0x17c] sm:$0xf] %v875
        %920 = vst [vmem:[#allocation4 + $0x1a0] sm:$0xf] %v878
        %921 = vst [vmem:[#allocation4 + $0x1c4] sm:$0xf] %v882
        %922 = vst [vmem:[#allocation4 + $0x1e8] sm:$0xf] %v885
        %923 = vst [vmem:[#allocation4 + $0x20c] sm:$0xf] %v889
        %924 = vst [vmem:[#allocation4 + $0x230] sm:$0xf] %v892
        %s925 = scalar_lea.vmem %s303, 64 [#allocation2]
        %v926 = vld [vmem:[%s925] sm:$0xf]
        %v927 = vld [vmem:[%s925 + $0x4] sm:$0xf]
        %v928 = vld [vmem:[%s925 + $0x10] sm:$0xf]
        %v929 = vld [vmem:[%s925 + $0x14] sm:$0xf]
        %v930 = vld [vmem:[%s925 + $0x20] sm:$0xf]
        %v931 = vld [vmem:[%s925 + $0x24] sm:$0xf]
        %v932 = vld [vmem:[%s925 + $0x30] sm:$0xf]
        %v933 = vld [vmem:[%s925 + $0x34] sm:$0xf]
        %v934 = vld [vmem:[%s925 + $0x40] sm:$0xf]
        %v935 = vld [vmem:[%s925 + $0x44] sm:$0xf]
        %v936 = vld [vmem:[%s925 + $0x50] sm:$0xf]
        %v937 = vld [vmem:[%s925 + $0x54] sm:$0xf]
        %v938 = vld [vmem:[%s925 + $0x60] sm:$0xf]
        %v939 = vld [vmem:[%s925 + $0x64] sm:$0xf]
        %v940 = vld [vmem:[%s925 + $0x70] sm:$0xf]
        %v941 = vld [vmem:[%s925 + $0x74] sm:$0xf]
        %942 = vst [vmem:[#allocation4 + $0x18] sm:$0xf] %v926
        %943 = vst [vmem:[#allocation4 + $0x3c] sm:$0xf] %v927
        %944 = vst [vmem:[#allocation4 + $0x60] sm:$0xf] %v928
        %945 = vst [vmem:[#allocation4 + $0x84] sm:$0xf] %v929
        %946 = vst [vmem:[#allocation4 + $0xa8] sm:$0xf] %v930
        %947 = vst [vmem:[#allocation4 + $0xcc] sm:$0xf] %v931
        %948 = vst [vmem:[#allocation4 + $0xf0] sm:$0xf] %v932
        %949 = vst [vmem:[#allocation4 + $0x114] sm:$0xf] %v933
        %950 = vst [vmem:[#allocation4 + $0x138] sm:$0xf] %v934
        %951 = vst [vmem:[#allocation4 + $0x15c] sm:$0xf] %v935
        %952 = vst [vmem:[#allocation4 + $0x180] sm:$0xf] %v936
        %953 = vst [vmem:[#allocation4 + $0x1a4] sm:$0xf] %v937
        %954 = vst [vmem:[#allocation4 + $0x1c8] sm:$0xf] %v938
        %955 = vst [vmem:[#allocation4 + $0x1ec] sm:$0xf] %v939
        %956 = vst [vmem:[#allocation4 + $0x210] sm:$0xf] %v940
        %957 = vst [vmem:[#allocation4 + $0x234] sm:$0xf] %v941
        %v958 = vld [vmem:[%s925] sm:$0xe]
        %v959 = vld [vmem:[%s925 + $0x4] sm:$0xf]
        %v960 = vld [vmem:[%s925 + $0x8] sm:$0x1]
        %v961 = vld [vmem:[%s925 + $0x10] sm:$0xe]
        %v962 = vld [vmem:[%s925 + $0x14] sm:$0xf]
        %v963 = vld [vmem:[%s925 + $0x18] sm:$0x1]
        %v964 = vld [vmem:[%s925 + $0x20] sm:$0xe]
        %v965 = vld [vmem:[%s925 + $0x24] sm:$0xf]
        %v966 = vld [vmem:[%s925 + $0x28] sm:$0x1]
        %v967 = vld [vmem:[%s925 + $0x30] sm:$0xe]
        %v968 = vld [vmem:[%s925 + $0x34] sm:$0xf]
        %v969 = vld [vmem:[%s925 + $0x38] sm:$0x1]
        %v970 = vld [vmem:[%s925 + $0x40] sm:$0xe]
        %v971 = vld [vmem:[%s925 + $0x44] sm:$0xf]
        %v972 = vld [vmem:[%s925 + $0x48] sm:$0x1]
        %v973 = vld [vmem:[%s925 + $0x50] sm:$0xe]
        %v974 = vld [vmem:[%s925 + $0x54] sm:$0xf]
        %v975 = vld [vmem:[%s925 + $0x58] sm:$0x1]
        %v976 = vld [vmem:[%s925 + $0x60] sm:$0xe]
        %v977 = vld [vmem:[%s925 + $0x64] sm:$0xf]
        %v978 = vld [vmem:[%s925 + $0x68] sm:$0x1]
        %v979 = vld [vmem:[%s925 + $0x70] sm:$0xe]
        %v980 = vld [vmem:[%s925 + $0x74] sm:$0xf]
        %v981 = vld [vmem:[%s925 + $0x78] sm:$0x1]
        %v1006 = vrot.slane %v958, 5
        %v1007 = vrot.slane %v1006, 4
        %v1008 = vrot.slane %v959, 5
        %v1009 = vsel %vm392, %v1007, %v1008
        %v1010 = vrot.slane %v1008, 4
        %v1011 = vrot.slane %v960, 5
        %v1012 = vsel %vm392, %v1010, %v1011
        %v1013 = vrot.slane %v961, 5
        %v1014 = vrot.slane %v1013, 4
        %v1015 = vrot.slane %v962, 5
        %v1016 = vsel %vm392, %v1014, %v1015
        %v1017 = vrot.slane %v1015, 4
        %v1018 = vrot.slane %v963, 5
        %v1019 = vsel %vm392, %v1017, %v1018
        %v1020 = vrot.slane %v964, 5
        %v1021 = vrot.slane %v1020, 4
        %v1022 = vrot.slane %v965, 5
        %v1023 = vsel %vm392, %v1021, %v1022
        %v1024 = vrot.slane %v1022, 4
        %v1025 = vrot.slane %v966, 5
        %v1026 = vsel %vm392, %v1024, %v1025
        %v1027 = vrot.slane %v967, 5
        %v1028 = vrot.slane %v1027, 4
        %v1029 = vrot.slane %v968, 5
        %v1030 = vsel %vm392, %v1028, %v1029
        %v1031 = vrot.slane %v1029, 4
        %v1032 = vrot.slane %v969, 5
        %v1033 = vsel %vm392, %v1031, %v1032
        %v1034 = vrot.slane %v970, 5
        %v1035 = vrot.slane %v1034, 4
        %v1036 = vrot.slane %v971, 5
        %v1037 = vsel %vm392, %v1035, %v1036
        %v1038 = vrot.slane %v1036, 4
        %v1039 = vrot.slane %v972, 5
        %v1040 = vsel %vm392, %v1038, %v1039
        %v1041 = vrot.slane %v973, 5
        %v1042 = vrot.slane %v1041, 4
        %v1043 = vrot.slane %v974, 5
        %v1044 = vsel %vm392, %v1042, %v1043
        %v1045 = vrot.slane %v1043, 4
        %v1046 = vrot.slane %v975, 5
        %v1047 = vsel %vm392, %v1045, %v1046
        %v1048 = vrot.slane %v976, 5
        %v1049 = vrot.slane %v1048, 4
        %v1050 = vrot.slane %v977, 5
        %v1051 = vsel %vm392, %v1049, %v1050
        %v1052 = vrot.slane %v1050, 4
        %v1053 = vrot.slane %v978, 5
        %v1054 = vsel %vm392, %v1052, %v1053
        %v1055 = vrot.slane %v979, 5
        %v1056 = vrot.slane %v1055, 4
        %v1057 = vrot.slane %v980, 5
        %v1058 = vsel %vm392, %v1056, %v1057
        %v1059 = vrot.slane %v1057, 4
        %v1060 = vrot.slane %v981, 5
        %v1061 = vsel %vm392, %v1059, %v1060
        %1078 = vst [vmem:[#allocation4 + $0x1c] sm:$0xf] %v1009
        %1079 = vst [vmem:[#allocation4 + $0x40] sm:$0xf] %v1012
        %1080 = vst [vmem:[#allocation4 + $0x64] sm:$0xf] %v1016
        %1081 = vst [vmem:[#allocation4 + $0x88] sm:$0xf] %v1019
        %1082 = vst [vmem:[#allocation4 + $0xac] sm:$0xf] %v1023
        %1083 = vst [vmem:[#allocation4 + $0xd0] sm:$0xf] %v1026
        %1084 = vst [vmem:[#allocation4 + $0xf4] sm:$0xf] %v1030
        %1085 = vst [vmem:[#allocation4 + $0x118] sm:$0xf] %v1033
        %1086 = vst [vmem:[#allocation4 + $0x13c] sm:$0xf] %v1037
        %1087 = vst [vmem:[#allocation4 + $0x160] sm:$0xf] %v1040
        %1088 = vst [vmem:[#allocation4 + $0x184] sm:$0xf] %v1044
        %1089 = vst [vmem:[#allocation4 + $0x1a8] sm:$0xf] %v1047
        %1090 = vst [vmem:[#allocation4 + $0x1cc] sm:$0xf] %v1051
        %1091 = vst [vmem:[#allocation4 + $0x1f0] sm:$0xf] %v1054
        %1092 = vst [vmem:[#allocation4 + $0x214] sm:$0xf] %v1058
        %1093 = vst [vmem:[#allocation4 + $0x238] sm:$0xf] %v1061
        %v1094 = vld [vmem:[%s925] sm:$0xc]
        %v1095 = vld [vmem:[%s925 + $0x4] sm:$0xf]
        %v1096 = vld [vmem:[%s925 + $0x8] sm:$0x3]
        %v1097 = vld [vmem:[%s925 + $0x10] sm:$0xc]
        %v1098 = vld [vmem:[%s925 + $0x14] sm:$0xf]
        %v1099 = vld [vmem:[%s925 + $0x18] sm:$0x3]
        %v1100 = vld [vmem:[%s925 + $0x20] sm:$0xc]
        %v1101 = vld [vmem:[%s925 + $0x24] sm:$0xf]
        %v1102 = vld [vmem:[%s925 + $0x28] sm:$0x3]
        %v1103 = vld [vmem:[%s925 + $0x30] sm:$0xc]
        %v1104 = vld [vmem:[%s925 + $0x34] sm:$0xf]
        %v1105 = vld [vmem:[%s925 + $0x38] sm:$0x3]
        %v1106 = vld [vmem:[%s925 + $0x40] sm:$0xc]
        %v1107 = vld [vmem:[%s925 + $0x44] sm:$0xf]
        %v1108 = vld [vmem:[%s925 + $0x48] sm:$0x3]
        %v1109 = vld [vmem:[%s925 + $0x50] sm:$0xc]
        %v1110 = vld [vmem:[%s925 + $0x54] sm:$0xf]
        %v1111 = vld [vmem:[%s925 + $0x58] sm:$0x3]
        %v1112 = vld [vmem:[%s925 + $0x60] sm:$0xc]
        %v1113 = vld [vmem:[%s925 + $0x64] sm:$0xf]
        %v1114 = vld [vmem:[%s925 + $0x68] sm:$0x3]
        %v1115 = vld [vmem:[%s925 + $0x70] sm:$0xc]
        %v1116 = vld [vmem:[%s925 + $0x74] sm:$0xf]
        %v1117 = vld [vmem:[%s925 + $0x78] sm:$0x3]
        %v1142 = vrot.slane %v1094, 6
        %v1143 = vrot.slane %v1142, 4
        %v1144 = vrot.slane %v1095, 6
        %v1145 = vsel %vm531, %v1143, %v1144
        %v1146 = vrot.slane %v1144, 4
        %v1147 = vrot.slane %v1096, 6
        %v1148 = vsel %vm531, %v1146, %v1147
        %v1149 = vrot.slane %v1097, 6
        %v1150 = vrot.slane %v1149, 4
        %v1151 = vrot.slane %v1098, 6
        %v1152 = vsel %vm531, %v1150, %v1151
        %v1153 = vrot.slane %v1151, 4
        %v1154 = vrot.slane %v1099, 6
        %v1155 = vsel %vm531, %v1153, %v1154
        %v1156 = vrot.slane %v1100, 6
        %v1157 = vrot.slane %v1156, 4
        %v1158 = vrot.slane %v1101, 6
        %v1159 = vsel %vm531, %v1157, %v1158
        %v1160 = vrot.slane %v1158, 4
        %v1161 = vrot.slane %v1102, 6
        %v1162 = vsel %vm531, %v1160, %v1161
        %v1163 = vrot.slane %v1103, 6
        %v1164 = vrot.slane %v1163, 4
        %v1165 = vrot.slane %v1104, 6
        %v1166 = vsel %vm531, %v1164, %v1165
        %v1167 = vrot.slane %v1165, 4
        %v1168 = vrot.slane %v1105, 6
        %v1169 = vsel %vm531, %v1167, %v1168
        %v1170 = vrot.slane %v1106, 6
        %v1171 = vrot.slane %v1170, 4
        %v1172 = vrot.slane %v1107, 6
        %v1173 = vsel %vm531, %v1171, %v1172
        %v1174 = vrot.slane %v1172, 4
        %v1175 = vrot.slane %v1108, 6
        %v1176 = vsel %vm531, %v1174, %v1175
        %v1177 = vrot.slane %v1109, 6
        %v1178 = vrot.slane %v1177, 4
        %v1179 = vrot.slane %v1110, 6
        %v1180 = vsel %vm531, %v1178, %v1179
        %v1181 = vrot.slane %v1179, 4
        %v1182 = vrot.slane %v1111, 6
        %v1183 = vsel %vm531, %v1181, %v1182
        %v1184 = vrot.slane %v1112, 6
        %v1185 = vrot.slane %v1184, 4
        %v1186 = vrot.slane %v1113, 6
        %v1187 = vsel %vm531, %v1185, %v1186
        %v1188 = vrot.slane %v1186, 4
        %v1189 = vrot.slane %v1114, 6
        %v1190 = vsel %vm531, %v1188, %v1189
        %v1191 = vrot.slane %v1115, 6
        %v1192 = vrot.slane %v1191, 4
        %v1193 = vrot.slane %v1116, 6
        %v1194 = vsel %vm531, %v1192, %v1193
        %v1195 = vrot.slane %v1193, 4
        %v1196 = vrot.slane %v1117, 6
        %v1197 = vsel %vm531, %v1195, %v1196
        %1214 = vst [vmem:[#allocation4 + $0x20] sm:$0xf] %v1145
        %1215 = vst [vmem:[#allocation4 + $0x44] sm:$0xf] %v1148
        %1216 = vst [vmem:[#allocation4 + $0x68] sm:$0xf] %v1152
        %1217 = vst [vmem:[#allocation4 + $0x8c] sm:$0xf] %v1155
        %1218 = vst [vmem:[#allocation4 + $0xb0] sm:$0xf] %v1159
        %1219 = vst [vmem:[#allocation4 + $0xd4] sm:$0xf] %v1162
        %1220 = vst [vmem:[#allocation4 + $0xf8] sm:$0xf] %v1166
        %1221 = vst [vmem:[#allocation4 + $0x11c] sm:$0xf] %v1169
        %1222 = vst [vmem:[#allocation4 + $0x140] sm:$0xf] %v1173
        %1223 = vst [vmem:[#allocation4 + $0x164] sm:$0xf] %v1176
        %1224 = vst [vmem:[#allocation4 + $0x188] sm:$0xf] %v1180
        %1225 = vst [vmem:[#allocation4 + $0x1ac] sm:$0xf] %v1183
        %1226 = vst [vmem:[#allocation4 + $0x1d0] sm:$0xf] %v1187
        %1227 = vst [vmem:[#allocation4 + $0x1f4] sm:$0xf] %v1190
        %1228 = vst [vmem:[#allocation4 + $0x218] sm:$0xf] %v1194
        %1229 = vst [vmem:[#allocation4 + $0x23c] sm:$0xf] %v1197
        %v1230 = vld [vmem:[#allocation4] sm:$0xff]
        %v1231 = vld [vmem:[#allocation4 + $0x8] sm:$0xff]
        %v1232 = vld [vmem:[#allocation4 + $0x10] sm:$0xff]
        %v1233 = vld [vmem:[#allocation4 + $0x18] sm:$0xff]
        %v1234 = vld [vmem:[#allocation4 + $0x20] sm:$0xf]
        %v1235 = vld [vmem:[#allocation4 + $0x24] sm:$0xff]
        %v1236 = vld [vmem:[#allocation4 + $0x2c] sm:$0xff]
        %v1237 = vld [vmem:[#allocation4 + $0x34] sm:$0xff]
        %v1238 = vld [vmem:[#allocation4 + $0x3c] sm:$0xff]
        %v1239 = vld [vmem:[#allocation4 + $0x44] sm:$0xf]
        %v1240 = vld [vmem:[#allocation4 + $0x48] sm:$0xff]
        %v1241 = vld [vmem:[#allocation4 + $0x50] sm:$0xff]
        %v1242 = vld [vmem:[#allocation4 + $0x58] sm:$0xff]
        %v1243 = vld [vmem:[#allocation4 + $0x60] sm:$0xff]
        %v1244 = vld [vmem:[#allocation4 + $0x68] sm:$0xf]
        %v1245 = vld [vmem:[#allocation4 + $0x6c] sm:$0xff]
        %v1246 = vld [vmem:[#allocation4 + $0x74] sm:$0xff]
        %v1247 = vld [vmem:[#allocation4 + $0x7c] sm:$0xff]
        %v1248 = vld [vmem:[#allocation4 + $0x84] sm:$0xff]
        %v1249 = vld [vmem:[#allocation4 + $0x8c] sm:$0xf]
        %v1250 = vld [vmem:[#allocation4 + $0x90] sm:$0xff]
        %v1251 = vld [vmem:[#allocation4 + $0x98] sm:$0xff]
        %v1252 = vld [vmem:[#allocation4 + $0xa0] sm:$0xff]
        %v1253 = vld [vmem:[#allocation4 + $0xa8] sm:$0xff]
        %v1254 = vld [vmem:[#allocation4 + $0xb0] sm:$0xf]
        %v1255 = vld [vmem:[#allocation4 + $0xb4] sm:$0xff]
        %v1256 = vld [vmem:[#allocation4 + $0xbc] sm:$0xff]
        %v1257 = vld [vmem:[#allocation4 + $0xc4] sm:$0xff]
        %v1258 = vld [vmem:[#allocation4 + $0xcc] sm:$0xff]
        %v1259 = vld [vmem:[#allocation4 + $0xd4] sm:$0xf]
        %v1260 = vld [vmem:[#allocation4 + $0xd8] sm:$0xff]
        %v1261 = vld [vmem:[#allocation4 + $0xe0] sm:$0xff]
        %v1262 = vld [vmem:[#allocation4 + $0xe8] sm:$0xff]
        %v1263 = vld [vmem:[#allocation4 + $0xf0] sm:$0xff]
        %v1264 = vld [vmem:[#allocation4 + $0xf8] sm:$0xf]
        %v1265 = vld [vmem:[#allocation4 + $0xfc] sm:$0xff]
        %v1266 = vld [vmem:[#allocation4 + $0x104] sm:$0xff]
        %v1267 = vld [vmem:[#allocation4 + $0x10c] sm:$0xff]
        %v1268 = vld [vmem:[#allocation4 + $0x114] sm:$0xff]
        %v1269 = vld [vmem:[#allocation4 + $0x11c] sm:$0xf]
        %v1270 = vld [vmem:[#allocation4 + $0x120] sm:$0xff]
        %v1271 = vld [vmem:[#allocation4 + $0x128] sm:$0xff]
        %v1272 = vld [vmem:[#allocation4 + $0x130] sm:$0xff]
        %v1273 = vld [vmem:[#allocation4 + $0x138] sm:$0xff]
        %v1274 = vld [vmem:[#allocation4 + $0x140] sm:$0xf]
        %v1275 = vld [vmem:[#allocation4 + $0x144] sm:$0xff]
        %v1276 = vld [vmem:[#allocation4 + $0x14c] sm:$0xff]
        %v1277 = vld [vmem:[#allocation4 + $0x154] sm:$0xff]
        %v1278 = vld [vmem:[#allocation4 + $0x15c] sm:$0xff]
        %v1279 = vld [vmem:[#allocation4 + $0x164] sm:$0xf]
        %v1280 = vld [vmem:[#allocation4 + $0x168] sm:$0xff]
        %v1281 = vld [vmem:[#allocation4 + $0x170] sm:$0xff]
        %v1282 = vld [vmem:[#allocation4 + $0x178] sm:$0xff]
        %v1283 = vld [vmem:[#allocation4 + $0x180] sm:$0xff]
        %v1284 = vld [vmem:[#allocation4 + $0x188] sm:$0xf]
        %v1285 = vld [vmem:[#allocation4 + $0x18c] sm:$0xff]
        %v1286 = vld [vmem:[#allocation4 + $0x194] sm:$0xff]
        %v1287 = vld [vmem:[#allocation4 + $0x19c] sm:$0xff]
        %v1288 = vld [vmem:[#allocation4 + $0x1a4] sm:$0xff]
        %v1289 = vld [vmem:[#allocation4 + $0x1ac] sm:$0xf]
        %v1290 = vld [vmem:[#allocation4 + $0x1b0] sm:$0xff]
        %v1291 = vld [vmem:[#allocation4 + $0x1b8] sm:$0xff]
        %v1292 = vld [vmem:[#allocation4 + $0x1c0] sm:$0xff]
        %v1293 = vld [vmem:[#allocation4 + $0x1c8] sm:$0xff]
        %v1294 = vld [vmem:[#allocation4 + $0x1d0] sm:$0xf]
        %v1295 = vld [vmem:[#allocation4 + $0x1d4] sm:$0xff]
        %v1296 = vld [vmem:[#allocation4 + $0x1dc] sm:$0xff]
        %v1297 = vld [vmem:[#allocation4 + $0x1e4] sm:$0xff]
        %v1298 = vld [vmem:[#allocation4 + $0x1ec] sm:$0xff]
        %v1299 = vld [vmem:[#allocation4 + $0x1f4] sm:$0xf]
        %v1300 = vld [vmem:[#allocation4 + $0x1f8] sm:$0xff]
        %v1301 = vld [vmem:[#allocation4 + $0x200] sm:$0xff]
        %v1302 = vld [vmem:[#allocation4 + $0x208] sm:$0xff]
        %v1303 = vld [vmem:[#allocation4 + $0x210] sm:$0xff]
        %v1304 = vld [vmem:[#allocation4 + $0x218] sm:$0xf]
        %v1305 = vld [vmem:[#allocation4 + $0x21c] sm:$0xff]
        %v1306 = vld [vmem:[#allocation4 + $0x224] sm:$0xff]
        %v1307 = vld [vmem:[#allocation4 + $0x22c] sm:$0xff]
        %v1308 = vld [vmem:[#allocation4 + $0x234] sm:$0xff]
        %v1309 = vld [vmem:[#allocation4 + $0x23c] sm:$0xf]
        %v1310 = vld [vmem:[%s1] sm:$0xf]
        %v1311 = vld [vmem:[%s1 + $0x4] sm:$0xf]
        %v1312 = vld [vmem:[%s1 + $0x8] sm:$0xf]
        %v1313 = vld [vmem:[%s1 + $0xc] sm:$0xf]
        %v1314 = vld [vmem:[%s1 + $0x10] sm:$0xf]
        %v1315 = vld [vmem:[%s1 + $0x14] sm:$0xf]
        %v1316 = vld [vmem:[%s1 + $0x18] sm:$0xf]
        %v1317 = vld [vmem:[%s1 + $0x1c] sm:$0xf]
        %v1318 = vld [vmem:[%s1 + $0x20] sm:$0xf]
        %v1319 = vld [vmem:[%s1 + $0x24] sm:$0xf]
        %v1320 = vld [vmem:[%s1 + $0x28] sm:$0xf]
        %v1321 = vld [vmem:[%s1 + $0x2c] sm:$0xf]
        %v1322 = vld [vmem:[%s1 + $0x30] sm:$0xf]
        %v1323 = vld [vmem:[%s1 + $0x34] sm:$0xf]
        %v1324 = vld [vmem:[%s1 + $0x38] sm:$0xf]
        %v1325 = vld [vmem:[%s1 + $0x3c] sm:$0xf]
        %v1326 = vld [vmem:[%s1 + $0x40] sm:$0xf]
        %v1327 = vld [vmem:[%s1 + $0x44] sm:$0xf]
        %v1328 = vld [vmem:[%s1 + $0x48] sm:$0xf]
        %v1329 = vld [vmem:[%s1 + $0x4c] sm:$0xf]
        %v1330 = vld [vmem:[%s1 + $0x50] sm:$0xf]
        %v1331 = vld [vmem:[%s1 + $0x54] sm:$0xf]
        %v1332 = vld [vmem:[%s1 + $0x58] sm:$0xf]
        %v1333 = vld [vmem:[%s1 + $0x5c] sm:$0xf]
        %v1334 = vld [vmem:[%s1 + $0x60] sm:$0xf]
        %v1335 = vld [vmem:[%s1 + $0x64] sm:$0xf]
        %v1336 = vld [vmem:[%s1 + $0x68] sm:$0xf]
        %v1337 = vld [vmem:[%s1 + $0x6c] sm:$0xf]
        %v1338 = vld [vmem:[%s1 + $0x70] sm:$0xf]
        %v1339 = vld [vmem:[%s1 + $0x74] sm:$0xf]
        %v1340 = vld [vmem:[%s1 + $0x78] sm:$0xf]
        %v1341 = vld [vmem:[%s1 + $0x7c] sm:$0xf]
        %v1342 = vld [vmem:[%s1 + $0x80] sm:$0xf]
        %v1343 = vld [vmem:[%s1 + $0x84] sm:$0xf]
        %v1344 = vld [vmem:[%s1 + $0x88] sm:$0xf]
        %v1345 = vld [vmem:[%s1 + $0x8c] sm:$0xf]
        %v1346 = vld [vmem:[%s1 + $0x90] sm:$0xf]
        %v1347 = vld [vmem:[%s1 + $0x94] sm:$0xf]
        %v1348 = vld [vmem:[%s1 + $0x98] sm:$0xf]
        %v1349 = vld [vmem:[%s1 + $0x9c] sm:$0xf]
        %v1350 = vld [vmem:[%s1 + $0xa0] sm:$0xf]
        %v1351 = vld [vmem:[%s1 + $0xa4] sm:$0xf]
        %v1352 = vld [vmem:[%s1 + $0xa8] sm:$0xf]
        %v1353 = vld [vmem:[%s1 + $0xac] sm:$0xf]
        %v1354 = vld [vmem:[%s1 + $0xb0] sm:$0xf]
        %v1355 = vld [vmem:[%s1 + $0xb4] sm:$0xf]
        %v1356 = vld [vmem:[%s1 + $0xb8] sm:$0xf]
        %v1357 = vld [vmem:[%s1 + $0xbc] sm:$0xf]
        %v1358 = vld [vmem:[%s1 + $0xc0] sm:$0xf]
        %v1359 = vld [vmem:[%s1 + $0xc4] sm:$0xf]
        %v1360 = vld [vmem:[%s1 + $0xc8] sm:$0xf]
        %v1361 = vld [vmem:[%s1 + $0xcc] sm:$0xf]
        %v1362 = vld [vmem:[%s1 + $0xd0] sm:$0xf]
        %v1363 = vld [vmem:[%s1 + $0xd4] sm:$0xf]
        %v1364 = vld [vmem:[%s1 + $0xd8] sm:$0xf]
        %v1365 = vld [vmem:[%s1 + $0xdc] sm:$0xf]
        %v1366 = vld [vmem:[%s1 + $0xe0] sm:$0xf]
        %v1367 = vld [vmem:[%s1 + $0xe4] sm:$0xf]
        %v1368 = vld [vmem:[%s1 + $0xe8] sm:$0xf]
        %v1369 = vld [vmem:[%s1 + $0xec] sm:$0xf]
        %v1370 = vld [vmem:[%s1 + $0xf0] sm:$0xf]
        %v1371 = vld [vmem:[%s1 + $0xf4] sm:$0xf]
        %v1372 = vld [vmem:[%s1 + $0xf8] sm:$0xf]
        %v1373 = vld [vmem:[%s1 + $0xfc] sm:$0xf]
        %v1374 = vld [vmem:[%s1 + $0x100] sm:$0xf]
        %v1375 = vld [vmem:[%s1 + $0x104] sm:$0xf]
        %v1376 = vld [vmem:[%s1 + $0x108] sm:$0xf]
        %v1377 = vld [vmem:[%s1 + $0x10c] sm:$0xf]
        %v1378 = vld [vmem:[%s1 + $0x110] sm:$0xf]
        %v1379 = vld [vmem:[%s1 + $0x114] sm:$0xf]
        %v1380 = vld [vmem:[%s1 + $0x118] sm:$0xf]
        %v1381 = vld [vmem:[%s1 + $0x11c] sm:$0xf]
        %v1382 = vld [vmem:[%s1 + $0x120] sm:$0xf]
        %v1383 = vld [vmem:[%s1 + $0x124] sm:$0xf]
        %v1384 = vld [vmem:[%s1 + $0x128] sm:$0xf]
        %v1385 = vld [vmem:[%s1 + $0x12c] sm:$0xf]
        %v1386 = vld [vmem:[%s1 + $0x130] sm:$0xf]
        %v1387 = vld [vmem:[%s1 + $0x134] sm:$0xf]
        %v1388 = vld [vmem:[%s1 + $0x138] sm:$0xf]
        %v1389 = vld [vmem:[%s1 + $0x13c] sm:$0xf]
        %v1390 = vld [vmem:[%s1 + $0x140] sm:$0xf]
        %v1391 = vld [vmem:[%s1 + $0x144] sm:$0xf]
        %v1392 = vld [vmem:[%s1 + $0x148] sm:$0xf]
        %v1393 = vld [vmem:[%s1 + $0x14c] sm:$0xf]
        %v1394 = vld [vmem:[%s1 + $0x150] sm:$0xf]
        %v1395 = vld [vmem:[%s1 + $0x154] sm:$0xf]
        %v1396 = vld [vmem:[%s1 + $0x158] sm:$0xf]
        %v1397 = vld [vmem:[%s1 + $0x15c] sm:$0xf]
        %v1398 = vld [vmem:[%s1 + $0x160] sm:$0xf]
        %v1399 = vld [vmem:[%s1 + $0x164] sm:$0xf]
        %v1400 = vld [vmem:[%s1 + $0x168] sm:$0xf]
        %v1401 = vld [vmem:[%s1 + $0x16c] sm:$0xf]
        %v1402 = vld [vmem:[%s1 + $0x170] sm:$0xf]
        %v1403 = vld [vmem:[%s1 + $0x174] sm:$0xf]
        %v1404 = vld [vmem:[%s1 + $0x178] sm:$0xf]
        %v1405 = vld [vmem:[%s1 + $0x17c] sm:$0xf]
        %v1406 = vld [vmem:[%s1 + $0x180] sm:$0xf]
        %v1407 = vld [vmem:[%s1 + $0x184] sm:$0xf]
        %v1408 = vld [vmem:[%s1 + $0x188] sm:$0xf]
        %v1409 = vld [vmem:[%s1 + $0x18c] sm:$0xf]
        %v1410 = vld [vmem:[%s1 + $0x190] sm:$0xf]
        %v1411 = vld [vmem:[%s1 + $0x194] sm:$0xf]
        %v1412 = vld [vmem:[%s1 + $0x198] sm:$0xf]
        %v1413 = vld [vmem:[%s1 + $0x19c] sm:$0xf]
        %v1414 = vld [vmem:[%s1 + $0x1a0] sm:$0xf]
        %v1415 = vld [vmem:[%s1 + $0x1a4] sm:$0xf]
        %v1416 = vld [vmem:[%s1 + $0x1a8] sm:$0xf]
        %v1417 = vld [vmem:[%s1 + $0x1ac] sm:$0xf]
        %v1418 = vld [vmem:[%s1 + $0x1b0] sm:$0xf]
        %v1419 = vld [vmem:[%s1 + $0x1b4] sm:$0xf]
        %v1420 = vld [vmem:[%s1 + $0x1b8] sm:$0xf]
        %v1421 = vld [vmem:[%s1 + $0x1bc] sm:$0xf]
        %v1422 = vld [vmem:[%s1 + $0x1c0] sm:$0xf]
        %v1423 = vld [vmem:[%s1 + $0x1c4] sm:$0xf]
        %v1424 = vld [vmem:[%s1 + $0x1c8] sm:$0xf]
        %v1425 = vld [vmem:[%s1 + $0x1cc] sm:$0xf]
        %v1426 = vld [vmem:[%s1 + $0x1d0] sm:$0xf]
        %v1427 = vld [vmem:[%s1 + $0x1d4] sm:$0xf]
        %v1428 = vld [vmem:[%s1 + $0x1d8] sm:$0xf]
        %v1429 = vld [vmem:[%s1 + $0x1dc] sm:$0xf]
        %v1430 = vld [vmem:[%s1 + $0x1e0] sm:$0xf]
        %v1431 = vld [vmem:[%s1 + $0x1e4] sm:$0xf]
        %v1432 = vld [vmem:[%s1 + $0x1e8] sm:$0xf]
        %v1433 = vld [vmem:[%s1 + $0x1ec] sm:$0xf]
        %v1434 = vld [vmem:[%s1 + $0x1f0] sm:$0xf]
        %v1435 = vld [vmem:[%s1 + $0x1f4] sm:$0xf]
        %v1436 = vld [vmem:[%s1 + $0x1f8] sm:$0xf]
        %v1437 = vld [vmem:[%s1 + $0x1fc] sm:$0xf]
        %v1438 = vld [vmem:[%s1 + $0x200] sm:$0xf]
        %v1439 = vld [vmem:[%s1 + $0x204] sm:$0xf]
        %v1440 = vld [vmem:[%s1 + $0x208] sm:$0xf]
        %v1441 = vld [vmem:[%s1 + $0x20c] sm:$0xf]
        %v1442 = vld [vmem:[%s1 + $0x210] sm:$0xf]
        %v1443 = vld [vmem:[%s1 + $0x214] sm:$0xf]
        %v1444 = vld [vmem:[%s1 + $0x218] sm:$0xf]
        %v1445 = vld [vmem:[%s1 + $0x21c] sm:$0xf]
        %v1446 = vld [vmem:[%s1 + $0x220] sm:$0xf]
        %v1447 = vld [vmem:[%s1 + $0x224] sm:$0xf]
        %v1448 = vld [vmem:[%s1 + $0x228] sm:$0xf]
        %v1449 = vld [vmem:[%s1 + $0x22c] sm:$0xf]
        %v1450 = vld [vmem:[%s1 + $0x230] sm:$0xf]
        %v1451 = vld [vmem:[%s1 + $0x234] sm:$0xf]
        %v1452 = vld [vmem:[%s1 + $0x238] sm:$0xf]
        %v1453 = vld [vmem:[%s1 + $0x23c] sm:$0xf]
        %v1454 = vld [vmem:[%s2] sm:$0x1]
        %v1456 = vperm.slane %v1454, 0
        %v1538 = vunpack.c.l.b16 %v1230
        %v1539 = vunpack.c.h.b16 %v1230
        %v1540 = vunpack.c.l.b16 %v1231
        %v1541 = vunpack.c.h.b16 %v1231
        %v1542 = vunpack.c.l.b16 %v1232
        %v1543 = vunpack.c.h.b16 %v1232
        %v1544 = vunpack.c.l.b16 %v1233
        %v1545 = vunpack.c.h.b16 %v1233
        %v1546 = vunpack.c.l.b16 %v1234
        %v1547 = vunpack.c.l.b16 %v1235
        %v1548 = vunpack.c.h.b16 %v1235
        %v1549 = vunpack.c.l.b16 %v1236
        %v1550 = vunpack.c.h.b16 %v1236
        %v1551 = vunpack.c.l.b16 %v1237
        %v1552 = vunpack.c.h.b16 %v1237
        %v1553 = vunpack.c.l.b16 %v1238
        %v1554 = vunpack.c.h.b16 %v1238
        %v1555 = vunpack.c.l.b16 %v1239
        %v1556 = vunpack.c.l.b16 %v1240
        %v1557 = vunpack.c.h.b16 %v1240
        %v1558 = vunpack.c.l.b16 %v1241
        %v1559 = vunpack.c.h.b16 %v1241
        %v1560 = vunpack.c.l.b16 %v1242
        %v1561 = vunpack.c.h.b16 %v1242
        %v1562 = vunpack.c.l.b16 %v1243
        %v1563 = vunpack.c.h.b16 %v1243
        %v1564 = vunpack.c.l.b16 %v1244
        %v1565 = vunpack.c.l.b16 %v1245
        %v1566 = vunpack.c.h.b16 %v1245
        %v1567 = vunpack.c.l.b16 %v1246
        %v1568 = vunpack.c.h.b16 %v1246
        %v1569 = vunpack.c.l.b16 %v1247
        %v1570 = vunpack.c.h.b16 %v1247
        %v1571 = vunpack.c.l.b16 %v1248
        %v1572 = vunpack.c.h.b16 %v1248
        %v1573 = vunpack.c.l.b16 %v1249
        %v1574 = vunpack.c.l.b16 %v1250
        %v1575 = vunpack.c.h.b16 %v1250
        %v1576 = vunpack.c.l.b16 %v1251
        %v1577 = vunpack.c.h.b16 %v1251
        %v1578 = vunpack.c.l.b16 %v1252
        %v1579 = vunpack.c.h.b16 %v1252
        %v1580 = vunpack.c.l.b16 %v1253
        %v1581 = vunpack.c.h.b16 %v1253
        %v1582 = vunpack.c.l.b16 %v1254
        %v1583 = vunpack.c.l.b16 %v1255
        %v1584 = vunpack.c.h.b16 %v1255
        %v1585 = vunpack.c.l.b16 %v1256
        %v1586 = vunpack.c.h.b16 %v1256
        %v1587 = vunpack.c.l.b16 %v1257
        %v1588 = vunpack.c.h.b16 %v1257
        %v1589 = vunpack.c.l.b16 %v1258
        %v1590 = vunpack.c.h.b16 %v1258
        %v1591 = vunpack.c.l.b16 %v1259
        %v1592 = vunpack.c.l.b16 %v1260
        %v1593 = vunpack.c.h.b16 %v1260
        %v1594 = vunpack.c.l.b16 %v1261
        %v1595 = vunpack.c.h.b16 %v1261
        %v1596 = vunpack.c.l.b16 %v1262
        %v1597 = vunpack.c.h.b16 %v1262
        %v1598 = vunpack.c.l.b16 %v1263
        %v1599 = vunpack.c.h.b16 %v1263
        %v1600 = vunpack.c.l.b16 %v1264
        %v1601 = vunpack.c.l.b16 %v1265
        %v1602 = vunpack.c.h.b16 %v1265
        %v1603 = vunpack.c.l.b16 %v1266
        %v1604 = vunpack.c.h.b16 %v1266
        %v1605 = vunpack.c.l.b16 %v1267
        %v1606 = vunpack.c.h.b16 %v1267
        %v1607 = vunpack.c.l.b16 %v1268
        %v1608 = vunpack.c.h.b16 %v1268
        %v1609 = vunpack.c.l.b16 %v1269
        %v1610 = vunpack.c.l.b16 %v1270
        %v1611 = vunpack.c.h.b16 %v1270
        %v1612 = vunpack.c.l.b16 %v1271
        %v1613 = vunpack.c.h.b16 %v1271
        %v1614 = vunpack.c.l.b16 %v1272
        %v1615 = vunpack.c.h.b16 %v1272
        %v1616 = vunpack.c.l.b16 %v1273
        %v1617 = vunpack.c.h.b16 %v1273
        %v1618 = vunpack.c.l.b16 %v1274
        %v1619 = vunpack.c.l.b16 %v1275
        %v1620 = vunpack.c.h.b16 %v1275
        %v1621 = vunpack.c.l.b16 %v1276
        %v1622 = vunpack.c.h.b16 %v1276
        %v1623 = vunpack.c.l.b16 %v1277
        %v1624 = vunpack.c.h.b16 %v1277
        %v1625 = vunpack.c.l.b16 %v1278
        %v1626 = vunpack.c.h.b16 %v1278
        %v1627 = vunpack.c.l.b16 %v1279
        %v1628 = vunpack.c.l.b16 %v1280
        %v1629 = vunpack.c.h.b16 %v1280
        %v1630 = vunpack.c.l.b16 %v1281
        %v1631 = vunpack.c.h.b16 %v1281
        %v1632 = vunpack.c.l.b16 %v1282
        %v1633 = vunpack.c.h.b16 %v1282
        %v1634 = vunpack.c.l.b16 %v1283
        %v1635 = vunpack.c.h.b16 %v1283
        %v1636 = vunpack.c.l.b16 %v1284
        %v1637 = vunpack.c.l.b16 %v1285
        %v1638 = vunpack.c.h.b16 %v1285
        %v1639 = vunpack.c.l.b16 %v1286
        %v1640 = vunpack.c.h.b16 %v1286
        %v1641 = vunpack.c.l.b16 %v1287
        %v1642 = vunpack.c.h.b16 %v1287
        %v1643 = vunpack.c.l.b16 %v1288
        %v1644 = vunpack.c.h.b16 %v1288
        %v1645 = vunpack.c.l.b16 %v1289
        %v1646 = vunpack.c.l.b16 %v1290
        %v1647 = vunpack.c.h.b16 %v1290
        %v1648 = vunpack.c.l.b16 %v1291
        %v1649 = vunpack.c.h.b16 %v1291
        %v1650 = vunpack.c.l.b16 %v1292
        %v1651 = vunpack.c.h.b16 %v1292
        %v1652 = vunpack.c.l.b16 %v1293
        %v1653 = vunpack.c.h.b16 %v1293
        %v1654 = vunpack.c.l.b16 %v1294
        %v1655 = vunpack.c.l.b16 %v1295
        %v1656 = vunpack.c.h.b16 %v1295
        %v1657 = vunpack.c.l.b16 %v1296
        %v1658 = vunpack.c.h.b16 %v1296
        %v1659 = vunpack.c.l.b16 %v1297
        %v1660 = vunpack.c.h.b16 %v1297
        %v1661 = vunpack.c.l.b16 %v1298
        %v1662 = vunpack.c.h.b16 %v1298
        %v1663 = vunpack.c.l.b16 %v1299
        %v1664 = vunpack.c.l.b16 %v1300
        %v1665 = vunpack.c.h.b16 %v1300
        %v1666 = vunpack.c.l.b16 %v1301
        %v1667 = vunpack.c.h.b16 %v1301
        %v1668 = vunpack.c.l.b16 %v1302
        %v1669 = vunpack.c.h.b16 %v1302
        %v1670 = vunpack.c.l.b16 %v1303
        %v1671 = vunpack.c.h.b16 %v1303
        %v1672 = vunpack.c.l.b16 %v1304
        %v1673 = vunpack.c.l.b16 %v1305
        %v1674 = vunpack.c.h.b16 %v1305
        %v1675 = vunpack.c.l.b16 %v1306
        %v1676 = vunpack.c.h.b16 %v1306
        %v1677 = vunpack.c.l.b16 %v1307
        %v1678 = vunpack.c.h.b16 %v1307
        %v1679 = vunpack.c.l.b16 %v1308
        %v1680 = vunpack.c.h.b16 %v1308
        %v1681 = vunpack.c.l.b16 %v1309
        %v1682 = vpack.c.b16 %v1547, %v1538
        %v1683 = vpack.c.b16 %v1548, %v1539
        %v1684 = vpack.c.b16 %v1549, %v1540
        %v1685 = vpack.c.b16 %v1550, %v1541
        %v1686 = vpack.c.b16 %v1551, %v1542
        %v1687 = vpack.c.b16 %v1552, %v1543
        %v1688 = vpack.c.b16 %v1553, %v1544
        %v1689 = vpack.c.b16 %v1554, %v1545
        %v1690 = vpack.c.b16 %v1555, %v1546
        %v1691 = vpack.c.b16 %v1565, %v1556
        %v1692 = vpack.c.b16 %v1566, %v1557
        %v1693 = vpack.c.b16 %v1567, %v1558
        %v1694 = vpack.c.b16 %v1568, %v1559
        %v1695 = vpack.c.b16 %v1569, %v1560
        %v1696 = vpack.c.b16 %v1570, %v1561
        %v1697 = vpack.c.b16 %v1571, %v1562
        %v1698 = vpack.c.b16 %v1572, %v1563
        %v1699 = vpack.c.b16 %v1573, %v1564
        %v1700 = vpack.c.b16 %v1583, %v1574
        %v1701 = vpack.c.b16 %v1584, %v1575
        %v1702 = vpack.c.b16 %v1585, %v1576
        %v1703 = vpack.c.b16 %v1586, %v1577
        %v1704 = vpack.c.b16 %v1587, %v1578
        %v1705 = vpack.c.b16 %v1588, %v1579
        %v1706 = vpack.c.b16 %v1589, %v1580
        %v1707 = vpack.c.b16 %v1590, %v1581
        %v1708 = vpack.c.b16 %v1591, %v1582
        %v1709 = vpack.c.b16 %v1601, %v1592
        %v1710 = vpack.c.b16 %v1602, %v1593
        %v1711 = vpack.c.b16 %v1603, %v1594
        %v1712 = vpack.c.b16 %v1604, %v1595
        %v1713 = vpack.c.b16 %v1605, %v1596
        %v1714 = vpack.c.b16 %v1606, %v1597
        %v1715 = vpack.c.b16 %v1607, %v1598
        %v1716 = vpack.c.b16 %v1608, %v1599
        %v1717 = vpack.c.b16 %v1609, %v1600
        %v1718 = vpack.c.b16 %v1619, %v1610
        %v1719 = vpack.c.b16 %v1620, %v1611
        %v1720 = vpack.c.b16 %v1621, %v1612
        %v1721 = vpack.c.b16 %v1622, %v1613
        %v1722 = vpack.c.b16 %v1623, %v1614
        %v1723 = vpack.c.b16 %v1624, %v1615
        %v1724 = vpack.c.b16 %v1625, %v1616
        %v1725 = vpack.c.b16 %v1626, %v1617
        %v1726 = vpack.c.b16 %v1627, %v1618
        %v1727 = vpack.c.b16 %v1637, %v1628
        %v1728 = vpack.c.b16 %v1638, %v1629
        %v1729 = vpack.c.b16 %v1639, %v1630
        %v1730 = vpack.c.b16 %v1640, %v1631
        %v1731 = vpack.c.b16 %v1641, %v1632
        %v1732 = vpack.c.b16 %v1642, %v1633
        %v1733 = vpack.c.b16 %v1643, %v1634
        %v1734 = vpack.c.b16 %v1644, %v1635
        %v1735 = vpack.c.b16 %v1645, %v1636
        %v1736 = vpack.c.b16 %v1655, %v1646
        %v1737 = vpack.c.b16 %v1656, %v1647
        %v1738 = vpack.c.b16 %v1657, %v1648
        %v1739 = vpack.c.b16 %v1658, %v1649
        %v1740 = vpack.c.b16 %v1659, %v1650
        %v1741 = vpack.c.b16 %v1660, %v1651
        %v1742 = vpack.c.b16 %v1661, %v1652
        %v1743 = vpack.c.b16 %v1662, %v1653
        %v1744 = vpack.c.b16 %v1663, %v1654
        %v1745 = vpack.c.b16 %v1673, %v1664
        %v1746 = vpack.c.b16 %v1674, %v1665
        %v1747 = vpack.c.b16 %v1675, %v1666
        %v1748 = vpack.c.b16 %v1676, %v1667
        %v1749 = vpack.c.b16 %v1677, %v1668
        %v1750 = vpack.c.b16 %v1678, %v1669
        %v1751 = vpack.c.b16 %v1679, %v1670
        %v1752 = vpack.c.b16 %v1680, %v1671
        %v1753 = vpack.c.b16 %v1681, %v1672
        %v1970 = vunpack.c.l.b16 %v1310
        %v1971 = vunpack.c.l.b16 %v1311
        %v1972 = vunpack.c.l.b16 %v1312
        %v1973 = vunpack.c.l.b16 %v1313
        %v1974 = vunpack.c.l.b16 %v1314
        %v1975 = vunpack.c.l.b16 %v1315
        %v1976 = vunpack.c.l.b16 %v1316
        %v1977 = vunpack.c.l.b16 %v1317
        %v1978 = vunpack.c.l.b16 %v1318
        %v1979 = vunpack.c.l.b16 %v1319
        %v1980 = vunpack.c.l.b16 %v1320
        %v1981 = vunpack.c.l.b16 %v1321
        %v1982 = vunpack.c.l.b16 %v1322
        %v1983 = vunpack.c.l.b16 %v1323
        %v1984 = vunpack.c.l.b16 %v1324
        %v1985 = vunpack.c.l.b16 %v1325
        %v1986 = vunpack.c.l.b16 %v1326
        %v1987 = vunpack.c.l.b16 %v1327
        %v1988 = vunpack.c.l.b16 %v1328
        %v1989 = vunpack.c.l.b16 %v1329
        %v1990 = vunpack.c.l.b16 %v1330
        %v1991 = vunpack.c.l.b16 %v1331
        %v1992 = vunpack.c.l.b16 %v1332
        %v1993 = vunpack.c.l.b16 %v1333
        %v1994 = vunpack.c.l.b16 %v1334
        %v1995 = vunpack.c.l.b16 %v1335
        %v1996 = vunpack.c.l.b16 %v1336
        %v1997 = vunpack.c.l.b16 %v1337
        %v1998 = vunpack.c.l.b16 %v1338
        %v1999 = vunpack.c.l.b16 %v1339
        %v2000 = vunpack.c.l.b16 %v1340
        %v2001 = vunpack.c.l.b16 %v1341
        %v2002 = vunpack.c.l.b16 %v1342
        %v2003 = vunpack.c.l.b16 %v1343
        %v2004 = vunpack.c.l.b16 %v1344
        %v2005 = vunpack.c.l.b16 %v1345
        %v2006 = vunpack.c.l.b16 %v1346
        %v2007 = vunpack.c.l.b16 %v1347
        %v2008 = vunpack.c.l.b16 %v1348
        %v2009 = vunpack.c.l.b16 %v1349
        %v2010 = vunpack.c.l.b16 %v1350
        %v2011 = vunpack.c.l.b16 %v1351
        %v2012 = vunpack.c.l.b16 %v1352
        %v2013 = vunpack.c.l.b16 %v1353
        %v2014 = vunpack.c.l.b16 %v1354
        %v2015 = vunpack.c.l.b16 %v1355
        %v2016 = vunpack.c.l.b16 %v1356
        %v2017 = vunpack.c.l.b16 %v1357
        %v2018 = vunpack.c.l.b16 %v1358
        %v2019 = vunpack.c.l.b16 %v1359
        %v2020 = vunpack.c.l.b16 %v1360
        %v2021 = vunpack.c.l.b16 %v1361
        %v2022 = vunpack.c.l.b16 %v1362
        %v2023 = vunpack.c.l.b16 %v1363
        %v2024 = vunpack.c.l.b16 %v1364
        %v2025 = vunpack.c.l.b16 %v1365
        %v2026 = vunpack.c.l.b16 %v1366
        %v2027 = vunpack.c.l.b16 %v1367
        %v2028 = vunpack.c.l.b16 %v1368
        %v2029 = vunpack.c.l.b16 %v1369
        %v2030 = vunpack.c.l.b16 %v1370
        %v2031 = vunpack.c.l.b16 %v1371
        %v2032 = vunpack.c.l.b16 %v1372
        %v2033 = vunpack.c.l.b16 %v1373
        %v2034 = vunpack.c.l.b16 %v1374
        %v2035 = vunpack.c.l.b16 %v1375
        %v2036 = vunpack.c.l.b16 %v1376
        %v2037 = vunpack.c.l.b16 %v1377
        %v2038 = vunpack.c.l.b16 %v1378
        %v2039 = vunpack.c.l.b16 %v1379
        %v2040 = vunpack.c.l.b16 %v1380
        %v2041 = vunpack.c.l.b16 %v1381
        %v2042 = vunpack.c.l.b16 %v1382
        %v2043 = vunpack.c.l.b16 %v1383
        %v2044 = vunpack.c.l.b16 %v1384
        %v2045 = vunpack.c.l.b16 %v1385
        %v2046 = vunpack.c.l.b16 %v1386
        %v2047 = vunpack.c.l.b16 %v1387
        %v2048 = vunpack.c.l.b16 %v1388
        %v2049 = vunpack.c.l.b16 %v1389
        %v2050 = vunpack.c.l.b16 %v1390
        %v2051 = vunpack.c.l.b16 %v1391
        %v2052 = vunpack.c.l.b16 %v1392
        %v2053 = vunpack.c.l.b16 %v1393
        %v2054 = vunpack.c.l.b16 %v1394
        %v2055 = vunpack.c.l.b16 %v1395
        %v2056 = vunpack.c.l.b16 %v1396
        %v2057 = vunpack.c.l.b16 %v1397
        %v2058 = vunpack.c.l.b16 %v1398
        %v2059 = vunpack.c.l.b16 %v1399
        %v2060 = vunpack.c.l.b16 %v1400
        %v2061 = vunpack.c.l.b16 %v1401
        %v2062 = vunpack.c.l.b16 %v1402
        %v2063 = vunpack.c.l.b16 %v1403
        %v2064 = vunpack.c.l.b16 %v1404
        %v2065 = vunpack.c.l.b16 %v1405
        %v2066 = vunpack.c.l.b16 %v1406
        %v2067 = vunpack.c.l.b16 %v1407
        %v2068 = vunpack.c.l.b16 %v1408
        %v2069 = vunpack.c.l.b16 %v1409
        %v2070 = vunpack.c.l.b16 %v1410
        %v2071 = vunpack.c.l.b16 %v1411
        %v2072 = vunpack.c.l.b16 %v1412
        %v2073 = vunpack.c.l.b16 %v1413
        %v2074 = vunpack.c.l.b16 %v1414
        %v2075 = vunpack.c.l.b16 %v1415
        %v2076 = vunpack.c.l.b16 %v1416
        %v2077 = vunpack.c.l.b16 %v1417
        %v2078 = vunpack.c.l.b16 %v1418
        %v2079 = vunpack.c.l.b16 %v1419
        %v2080 = vunpack.c.l.b16 %v1420
        %v2081 = vunpack.c.l.b16 %v1421
        %v2082 = vunpack.c.l.b16 %v1422
        %v2083 = vunpack.c.l.b16 %v1423
        %v2084 = vunpack.c.l.b16 %v1424
        %v2085 = vunpack.c.l.b16 %v1425
        %v2086 = vunpack.c.l.b16 %v1426
        %v2087 = vunpack.c.l.b16 %v1427
        %v2088 = vunpack.c.l.b16 %v1428
        %v2089 = vunpack.c.l.b16 %v1429
        %v2090 = vunpack.c.l.b16 %v1430
        %v2091 = vunpack.c.l.b16 %v1431
        %v2092 = vunpack.c.l.b16 %v1432
        %v2093 = vunpack.c.l.b16 %v1433
        %v2094 = vunpack.c.l.b16 %v1434
        %v2095 = vunpack.c.l.b16 %v1435
        %v2096 = vunpack.c.l.b16 %v1436
        %v2097 = vunpack.c.l.b16 %v1437
        %v2098 = vunpack.c.l.b16 %v1438
        %v2099 = vunpack.c.l.b16 %v1439
        %v2100 = vunpack.c.l.b16 %v1440
        %v2101 = vunpack.c.l.b16 %v1441
        %v2102 = vunpack.c.l.b16 %v1442
        %v2103 = vunpack.c.l.b16 %v1443
        %v2104 = vunpack.c.l.b16 %v1444
        %v2105 = vunpack.c.l.b16 %v1445
        %v2106 = vunpack.c.l.b16 %v1446
        %v2107 = vunpack.c.l.b16 %v1447
        %v2108 = vunpack.c.l.b16 %v1448
        %v2109 = vunpack.c.l.b16 %v1449
        %v2110 = vunpack.c.l.b16 %v1450
        %v2111 = vunpack.c.l.b16 %v1451
        %v2112 = vunpack.c.l.b16 %v1452
        %v2113 = vunpack.c.l.b16 %v1453
        %v2114 = vpack.c.b16 %v1971, %v1970
        %v2115 = vpack.c.b16 %v1973, %v1972
        %v2116 = vpack.c.b16 %v1975, %v1974
        %v2117 = vpack.c.b16 %v1977, %v1976
        %v2118 = vpack.c.b16 %v1979, %v1978
        %v2119 = vpack.c.b16 %v1981, %v1980
        %v2120 = vpack.c.b16 %v1983, %v1982
        %v2121 = vpack.c.b16 %v1985, %v1984
        %v2122 = vpack.c.b16 %v1987, %v1986
        %v2123 = vpack.c.b16 %v1989, %v1988
        %v2124 = vpack.c.b16 %v1991, %v1990
        %v2125 = vpack.c.b16 %v1993, %v1992
        %v2126 = vpack.c.b16 %v1995, %v1994
        %v2127 = vpack.c.b16 %v1997, %v1996
        %v2128 = vpack.c.b16 %v1999, %v1998
        %v2129 = vpack.c.b16 %v2001, %v2000
        %v2130 = vpack.c.b16 %v2003, %v2002
        %v2131 = vpack.c.b16 %v2005, %v2004
        %v2132 = vpack.c.b16 %v2007, %v2006
        %v2133 = vpack.c.b16 %v2009, %v2008
        %v2134 = vpack.c.b16 %v2011, %v2010
        %v2135 = vpack.c.b16 %v2013, %v2012
        %v2136 = vpack.c.b16 %v2015, %v2014
        %v2137 = vpack.c.b16 %v2017, %v2016
        %v2138 = vpack.c.b16 %v2019, %v2018
        %v2139 = vpack.c.b16 %v2021, %v2020
        %v2140 = vpack.c.b16 %v2023, %v2022
        %v2141 = vpack.c.b16 %v2025, %v2024
        %v2142 = vpack.c.b16 %v2027, %v2026
        %v2143 = vpack.c.b16 %v2029, %v2028
        %v2144 = vpack.c.b16 %v2031, %v2030
        %v2145 = vpack.c.b16 %v2033, %v2032
        %v2146 = vpack.c.b16 %v2035, %v2034
        %v2147 = vpack.c.b16 %v2037, %v2036
        %v2148 = vpack.c.b16 %v2039, %v2038
        %v2149 = vpack.c.b16 %v2041, %v2040
        %v2150 = vpack.c.b16 %v2043, %v2042
        %v2151 = vpack.c.b16 %v2045, %v2044
        %v2152 = vpack.c.b16 %v2047, %v2046
        %v2153 = vpack.c.b16 %v2049, %v2048
        %v2154 = vpack.c.b16 %v2051, %v2050
        %v2155 = vpack.c.b16 %v2053, %v2052
        %v2156 = vpack.c.b16 %v2055, %v2054
        %v2157 = vpack.c.b16 %v2057, %v2056
        %v2158 = vpack.c.b16 %v2059, %v2058
        %v2159 = vpack.c.b16 %v2061, %v2060
        %v2160 = vpack.c.b16 %v2063, %v2062
        %v2161 = vpack.c.b16 %v2065, %v2064
        %v2162 = vpack.c.b16 %v2067, %v2066
        %v2163 = vpack.c.b16 %v2069, %v2068
        %v2164 = vpack.c.b16 %v2071, %v2070
        %v2165 = vpack.c.b16 %v2073, %v2072
        %v2166 = vpack.c.b16 %v2075, %v2074
        %v2167 = vpack.c.b16 %v2077, %v2076
        %v2168 = vpack.c.b16 %v2079, %v2078
        %v2169 = vpack.c.b16 %v2081, %v2080
        %v2170 = vpack.c.b16 %v2083, %v2082
        %v2171 = vpack.c.b16 %v2085, %v2084
        %v2172 = vpack.c.b16 %v2087, %v2086
        %v2173 = vpack.c.b16 %v2089, %v2088
        %v2174 = vpack.c.b16 %v2091, %v2090
        %v2175 = vpack.c.b16 %v2093, %v2092
        %v2176 = vpack.c.b16 %v2095, %v2094
        %v2177 = vpack.c.b16 %v2097, %v2096
        %v2178 = vpack.c.b16 %v2099, %v2098
        %v2179 = vpack.c.b16 %v2101, %v2100
        %v2180 = vpack.c.b16 %v2103, %v2102
        %v2181 = vpack.c.b16 %v2105, %v2104
        %v2182 = vpack.c.b16 %v2107, %v2106
        %v2183 = vpack.c.b16 %v2109, %v2108
        %v2184 = vpack.c.b16 %v2111, %v2110
        %v2185 = vpack.c.b16 %v2113, %v2112
        %2258 = vmatpush.bf16.msra.mxu0 %v2121
        %2259 = vmatpush.bf16.msra.mxu0 %v2120
        %2260 = vmatpush.bf16.msra.mxu0 %v2119
        %2261 = vmatpush.bf16.msra.mxu0 %v2118
        %2262 = vmatpush.bf16.msra.mxu0 %v2117
        %2263 = vmatpush.bf16.msra.mxu0 %v2116
        %2264 = vmatpush.bf16.msra.mxu0 %v2115
        %2265 = vmatpush.bf16.msra.mxu0 %v2114
        %2266 = vmatmul.bf16.gmra.mxu0 %v1682
        %v2267 = vpop.f32.mrf.mxu0
        %v2268 = vadd.f32 %v1456, %v2267
        %v2269 = vpop.f32.mrf.mxu0
        %v2270 = vadd.f32 %v1456, %v2269
        %2271 = vmatmul.bf16.gmra.mxu0 %v1691
        %v2272 = vpop.f32.mrf.mxu0
        %v2273 = vadd.f32 %v1456, %v2272
        %v2274 = vpop.f32.mrf.mxu0
        %v2275 = vadd.f32 %v1456, %v2274
        %2276 = vmatmul.bf16.gmra.mxu0 %v1700
        %v2277 = vpop.f32.mrf.mxu0
        %v2278 = vadd.f32 %v1456, %v2277
        %v2279 = vpop.f32.mrf.mxu0
        %v2280 = vadd.f32 %v1456, %v2279
        %2281 = vmatmul.bf16.gmra.mxu0 %v1709
        %v2282 = vpop.f32.mrf.mxu0
        %v2283 = vadd.f32 %v1456, %v2282
        %v2284 = vpop.f32.mrf.mxu0
        %v2285 = vadd.f32 %v1456, %v2284
        %2286 = vmatmul.bf16.gmra.mxu0 %v1718
        %v2287 = vpop.f32.mrf.mxu0
        %v2288 = vadd.f32 %v1456, %v2287
        %v2289 = vpop.f32.mrf.mxu0
        %v2290 = vadd.f32 %v1456, %v2289
        %2291 = vmatmul.bf16.gmra.mxu0 %v1727
        %v2292 = vpop.f32.mrf.mxu0
        %v2293 = vadd.f32 %v1456, %v2292
        %v2294 = vpop.f32.mrf.mxu0
        %v2295 = vadd.f32 %v1456, %v2294
        %2296 = vmatmul.bf16.gmra.mxu0 %v1736
        %v2297 = vpop.f32.mrf.mxu0
        %v2298 = vadd.f32 %v1456, %v2297
        %v2299 = vpop.f32.mrf.mxu0
        %v2300 = vadd.f32 %v1456, %v2299
        %2301 = vmatmul.bf16.gmra.mxu0 %v1745
        %v2302 = vpop.f32.mrf.mxu0
        %v2303 = vadd.f32 %v1456, %v2302
        %v2304 = vpop.f32.mrf.mxu0
        %v2305 = vadd.f32 %v1456, %v2304
        %2306 = vdwg.mxu0
        %2307 = vmatpush.bf16.msra.mxu0 %v2129
        %2308 = vmatpush.bf16.msra.mxu0 %v2128
        %2309 = vmatpush.bf16.msra.mxu0 %v2127
        %2310 = vmatpush.bf16.msra.mxu0 %v2126
        %2311 = vmatpush.bf16.msra.mxu0 %v2125
        %2312 = vmatpush.bf16.msra.mxu0 %v2124
        %2313 = vmatpush.bf16.msra.mxu0 %v2123
        %2314 = vmatpush.bf16.msra.mxu0 %v2122
        %2315 = vmatmul.bf16.gmra.mxu0 %v1683
        %v2316 = vpop.f32.mrf.mxu0
        %v2317 = vadd.f32 %v2268, %v2316
        %v2318 = vpop.f32.mrf.mxu0
        %v2319 = vadd.f32 %v2270, %v2318
        %2320 = vmatmul.bf16.gmra.mxu0 %v1692
        %v2321 = vpop.f32.mrf.mxu0
        %v2322 = vadd.f32 %v2273, %v2321
        %v2323 = vpop.f32.mrf.mxu0
        %v2324 = vadd.f32 %v2275, %v2323
        %2325 = vmatmul.bf16.gmra.mxu0 %v1701
        %v2326 = vpop.f32.mrf.mxu0
        %v2327 = vadd.f32 %v2278, %v2326
        %v2328 = vpop.f32.mrf.mxu0
        %v2329 = vadd.f32 %v2280, %v2328
        %2330 = vmatmul.bf16.gmra.mxu0 %v1710
        %v2331 = vpop.f32.mrf.mxu0
        %v2332 = vadd.f32 %v2283, %v2331
        %v2333 = vpop.f32.mrf.mxu0
        %v2334 = vadd.f32 %v2285, %v2333
        %2335 = vmatmul.bf16.gmra.mxu0 %v1719
        %v2336 = vpop.f32.mrf.mxu0
        %v2337 = vadd.f32 %v2288, %v2336
        %v2338 = vpop.f32.mrf.mxu0
        %v2339 = vadd.f32 %v2290, %v2338
        %2340 = vmatmul.bf16.gmra.mxu0 %v1728
        %v2341 = vpop.f32.mrf.mxu0
        %v2342 = vadd.f32 %v2293, %v2341
        %v2343 = vpop.f32.mrf.mxu0
        %v2344 = vadd.f32 %v2295, %v2343
        %2345 = vmatmul.bf16.gmra.mxu0 %v1737
        %v2346 = vpop.f32.mrf.mxu0
        %v2347 = vadd.f32 %v2298, %v2346
        %v2348 = vpop.f32.mrf.mxu0
        %v2349 = vadd.f32 %v2300, %v2348
        %2350 = vmatmul.bf16.gmra.mxu0 %v1746
        %v2351 = vpop.f32.mrf.mxu0
        %v2352 = vadd.f32 %v2303, %v2351
        %v2353 = vpop.f32.mrf.mxu0
        %v2354 = vadd.f32 %v2305, %v2353
        %2355 = vdwg.mxu0
        %2356 = vmatpush.bf16.msra.mxu0 %v2137
        %2357 = vmatpush.bf16.msra.mxu0 %v2136
        %2358 = vmatpush.bf16.msra.mxu0 %v2135
        %2359 = vmatpush.bf16.msra.mxu0 %v2134
        %2360 = vmatpush.bf16.msra.mxu0 %v2133
        %2361 = vmatpush.bf16.msra.mxu0 %v2132
        %2362 = vmatpush.bf16.msra.mxu0 %v2131
        %2363 = vmatpush.bf16.msra.mxu0 %v2130
        %2364 = vmatmul.bf16.gmra.mxu0 %v1684
        %v2365 = vpop.f32.mrf.mxu0
        %v2366 = vadd.f32 %v2317, %v2365
        %v2367 = vpop.f32.mrf.mxu0
        %v2368 = vadd.f32 %v2319, %v2367
        %2369 = vmatmul.bf16.gmra.mxu0 %v1693
        %v2370 = vpop.f32.mrf.mxu0
        %v2371 = vadd.f32 %v2322, %v2370
        %v2372 = vpop.f32.mrf.mxu0
        %v2373 = vadd.f32 %v2324, %v2372
        %2374 = vmatmul.bf16.gmra.mxu0 %v1702
        %v2375 = vpop.f32.mrf.mxu0
        %v2376 = vadd.f32 %v2327, %v2375
        %v2377 = vpop.f32.mrf.mxu0
        %v2378 = vadd.f32 %v2329, %v2377
        %2379 = vmatmul.bf16.gmra.mxu0 %v1711
        %v2380 = vpop.f32.mrf.mxu0
        %v2381 = vadd.f32 %v2332, %v2380
        %v2382 = vpop.f32.mrf.mxu0
        %v2383 = vadd.f32 %v2334, %v2382
        %2384 = vmatmul.bf16.gmra.mxu0 %v1720
        %v2385 = vpop.f32.mrf.mxu0
        %v2386 = vadd.f32 %v2337, %v2385
        %v2387 = vpop.f32.mrf.mxu0
        %v2388 = vadd.f32 %v2339, %v2387
        %2389 = vmatmul.bf16.gmra.mxu0 %v1729
        %v2390 = vpop.f32.mrf.mxu0
        %v2391 = vadd.f32 %v2342, %v2390
        %v2392 = vpop.f32.mrf.mxu0
        %v2393 = vadd.f32 %v2344, %v2392
        %2394 = vmatmul.bf16.gmra.mxu0 %v1738
        %v2395 = vpop.f32.mrf.mxu0
        %v2396 = vadd.f32 %v2347, %v2395
        %v2397 = vpop.f32.mrf.mxu0
        %v2398 = vadd.f32 %v2349, %v2397
        %2399 = vmatmul.bf16.gmra.mxu0 %v1747
        %v2400 = vpop.f32.mrf.mxu0
        %v2401 = vadd.f32 %v2352, %v2400
        %v2402 = vpop.f32.mrf.mxu0
        %v2403 = vadd.f32 %v2354, %v2402
        %2404 = vdwg.mxu0
        %2405 = vmatpush.bf16.msra.mxu0 %v2145
        %2406 = vmatpush.bf16.msra.mxu0 %v2144
        %2407 = vmatpush.bf16.msra.mxu0 %v2143
        %2408 = vmatpush.bf16.msra.mxu0 %v2142
        %2409 = vmatpush.bf16.msra.mxu0 %v2141
        %2410 = vmatpush.bf16.msra.mxu0 %v2140
        %2411 = vmatpush.bf16.msra.mxu0 %v2139
        %2412 = vmatpush.bf16.msra.mxu0 %v2138
        %2413 = vmatmul.bf16.gmra.mxu0 %v1685
        %v2414 = vpop.f32.mrf.mxu0
        %v2415 = vadd.f32 %v2366, %v2414
        %v2416 = vpop.f32.mrf.mxu0
        %v2417 = vadd.f32 %v2368, %v2416
        %2418 = vmatmul.bf16.gmra.mxu0 %v1694
        %v2419 = vpop.f32.mrf.mxu0
        %v2420 = vadd.f32 %v2371, %v2419
        %v2421 = vpop.f32.mrf.mxu0
        %v2422 = vadd.f32 %v2373, %v2421
        %2423 = vmatmul.bf16.gmra.mxu0 %v1703
        %v2424 = vpop.f32.mrf.mxu0
        %v2425 = vadd.f32 %v2376, %v2424
        %v2426 = vpop.f32.mrf.mxu0
        %v2427 = vadd.f32 %v2378, %v2426
        %2428 = vmatmul.bf16.gmra.mxu0 %v1712
        %v2429 = vpop.f32.mrf.mxu0
        %v2430 = vadd.f32 %v2381, %v2429
        %v2431 = vpop.f32.mrf.mxu0
        %v2432 = vadd.f32 %v2383, %v2431
        %2433 = vmatmul.bf16.gmra.mxu0 %v1721
        %v2434 = vpop.f32.mrf.mxu0
        %v2435 = vadd.f32 %v2386, %v2434
        %v2436 = vpop.f32.mrf.mxu0
        %v2437 = vadd.f32 %v2388, %v2436
        %2438 = vmatmul.bf16.gmra.mxu0 %v1730
        %v2439 = vpop.f32.mrf.mxu0
        %v2440 = vadd.f32 %v2391, %v2439
        %v2441 = vpop.f32.mrf.mxu0
        %v2442 = vadd.f32 %v2393, %v2441
        %2443 = vmatmul.bf16.gmra.mxu0 %v1739
        %v2444 = vpop.f32.mrf.mxu0
        %v2445 = vadd.f32 %v2396, %v2444
        %v2446 = vpop.f32.mrf.mxu0
        %v2447 = vadd.f32 %v2398, %v2446
        %2448 = vmatmul.bf16.gmra.mxu0 %v1748
        %v2449 = vpop.f32.mrf.mxu0
        %v2450 = vadd.f32 %v2401, %v2449
        %v2451 = vpop.f32.mrf.mxu0
        %v2452 = vadd.f32 %v2403, %v2451
        %2453 = vdwg.mxu0
        %2454 = vmatpush.bf16.msra.mxu0 %v2153
        %2455 = vmatpush.bf16.msra.mxu0 %v2152
        %2456 = vmatpush.bf16.msra.mxu0 %v2151
        %2457 = vmatpush.bf16.msra.mxu0 %v2150
        %2458 = vmatpush.bf16.msra.mxu0 %v2149
        %2459 = vmatpush.bf16.msra.mxu0 %v2148
        %2460 = vmatpush.bf16.msra.mxu0 %v2147
        %2461 = vmatpush.bf16.msra.mxu0 %v2146
        %2462 = vmatmul.bf16.gmra.mxu0 %v1686
        %v2463 = vpop.f32.mrf.mxu0
        %v2464 = vadd.f32 %v2415, %v2463
        %v2465 = vpop.f32.mrf.mxu0
        %v2466 = vadd.f32 %v2417, %v2465
        %2467 = vmatmul.bf16.gmra.mxu0 %v1695
        %v2468 = vpop.f32.mrf.mxu0
        %v2469 = vadd.f32 %v2420, %v2468
        %v2470 = vpop.f32.mrf.mxu0
        %v2471 = vadd.f32 %v2422, %v2470
        %2472 = vmatmul.bf16.gmra.mxu0 %v1704
        %v2473 = vpop.f32.mrf.mxu0
        %v2474 = vadd.f32 %v2425, %v2473
        %v2475 = vpop.f32.mrf.mxu0
        %v2476 = vadd.f32 %v2427, %v2475
        %2477 = vmatmul.bf16.gmra.mxu0 %v1713
        %v2478 = vpop.f32.mrf.mxu0
        %v2479 = vadd.f32 %v2430, %v2478
        %v2480 = vpop.f32.mrf.mxu0
        %v2481 = vadd.f32 %v2432, %v2480
        %2482 = vmatmul.bf16.gmra.mxu0 %v1722
        %v2483 = vpop.f32.mrf.mxu0
        %v2484 = vadd.f32 %v2435, %v2483
        %v2485 = vpop.f32.mrf.mxu0
        %v2486 = vadd.f32 %v2437, %v2485
        %2487 = vmatmul.bf16.gmra.mxu0 %v1731
        %v2488 = vpop.f32.mrf.mxu0
        %v2489 = vadd.f32 %v2440, %v2488
        %v2490 = vpop.f32.mrf.mxu0
        %v2491 = vadd.f32 %v2442, %v2490
        %2492 = vmatmul.bf16.gmra.mxu0 %v1740
        %v2493 = vpop.f32.mrf.mxu0
        %v2494 = vadd.f32 %v2445, %v2493
        %v2495 = vpop.f32.mrf.mxu0
        %v2496 = vadd.f32 %v2447, %v2495
        %2497 = vmatmul.bf16.gmra.mxu0 %v1749
        %v2498 = vpop.f32.mrf.mxu0
        %v2499 = vadd.f32 %v2450, %v2498
        %v2500 = vpop.f32.mrf.mxu0
        %v2501 = vadd.f32 %v2452, %v2500
        %2502 = vdwg.mxu0
        %2503 = vmatpush.bf16.msra.mxu0 %v2161
        %2504 = vmatpush.bf16.msra.mxu0 %v2160
        %2505 = vmatpush.bf16.msra.mxu0 %v2159
        %2506 = vmatpush.bf16.msra.mxu0 %v2158
        %2507 = vmatpush.bf16.msra.mxu0 %v2157
        %2508 = vmatpush.bf16.msra.mxu0 %v2156
        %2509 = vmatpush.bf16.msra.mxu0 %v2155
        %2510 = vmatpush.bf16.msra.mxu0 %v2154
        %2511 = vmatmul.bf16.gmra.mxu0 %v1687
        %v2512 = vpop.f32.mrf.mxu0
        %v2513 = vadd.f32 %v2464, %v2512
        %v2514 = vpop.f32.mrf.mxu0
        %v2515 = vadd.f32 %v2466, %v2514
        %2516 = vmatmul.bf16.gmra.mxu0 %v1696
        %v2517 = vpop.f32.mrf.mxu0
        %v2518 = vadd.f32 %v2469, %v2517
        %v2519 = vpop.f32.mrf.mxu0
        %v2520 = vadd.f32 %v2471, %v2519
        %2521 = vmatmul.bf16.gmra.mxu0 %v1705
        %v2522 = vpop.f32.mrf.mxu0
        %v2523 = vadd.f32 %v2474, %v2522
        %v2524 = vpop.f32.mrf.mxu0
        %v2525 = vadd.f32 %v2476, %v2524
        %2526 = vmatmul.bf16.gmra.mxu0 %v1714
        %v2527 = vpop.f32.mrf.mxu0
        %v2528 = vadd.f32 %v2479, %v2527
        %v2529 = vpop.f32.mrf.mxu0
        %v2530 = vadd.f32 %v2481, %v2529
        %2531 = vmatmul.bf16.gmra.mxu0 %v1723
        %v2532 = vpop.f32.mrf.mxu0
        %v2533 = vadd.f32 %v2484, %v2532
        %v2534 = vpop.f32.mrf.mxu0
        %v2535 = vadd.f32 %v2486, %v2534
        %2536 = vmatmul.bf16.gmra.mxu0 %v1732
        %v2537 = vpop.f32.mrf.mxu0
        %v2538 = vadd.f32 %v2489, %v2537
        %v2539 = vpop.f32.mrf.mxu0
        %v2540 = vadd.f32 %v2491, %v2539
        %2541 = vmatmul.bf16.gmra.mxu0 %v1741
        %v2542 = vpop.f32.mrf.mxu0
        %v2543 = vadd.f32 %v2494, %v2542
        %v2544 = vpop.f32.mrf.mxu0
        %v2545 = vadd.f32 %v2496, %v2544
        %2546 = vmatmul.bf16.gmra.mxu0 %v1750
        %v2547 = vpop.f32.mrf.mxu0
        %v2548 = vadd.f32 %v2499, %v2547
        %v2549 = vpop.f32.mrf.mxu0
        %v2550 = vadd.f32 %v2501, %v2549
        %2551 = vdwg.mxu0
        %2552 = vmatpush.bf16.msra.mxu0 %v2169
        %2553 = vmatpush.bf16.msra.mxu0 %v2168
        %2554 = vmatpush.bf16.msra.mxu0 %v2167
        %2555 = vmatpush.bf16.msra.mxu0 %v2166
        %2556 = vmatpush.bf16.msra.mxu0 %v2165
        %2557 = vmatpush.bf16.msra.mxu0 %v2164
        %2558 = vmatpush.bf16.msra.mxu0 %v2163
        %2559 = vmatpush.bf16.msra.mxu0 %v2162
        %2560 = vmatmul.bf16.gmra.mxu0 %v1688
        %v2561 = vpop.f32.mrf.mxu0
        %v2562 = vadd.f32 %v2513, %v2561
        %v2563 = vpop.f32.mrf.mxu0
        %v2564 = vadd.f32 %v2515, %v2563
        %2565 = vmatmul.bf16.gmra.mxu0 %v1697
        %v2566 = vpop.f32.mrf.mxu0
        %v2567 = vadd.f32 %v2518, %v2566
        %v2568 = vpop.f32.mrf.mxu0
        %v2569 = vadd.f32 %v2520, %v2568
        %2570 = vmatmul.bf16.gmra.mxu0 %v1706
        %v2571 = vpop.f32.mrf.mxu0
        %v2572 = vadd.f32 %v2523, %v2571
        %v2573 = vpop.f32.mrf.mxu0
        %v2574 = vadd.f32 %v2525, %v2573
        %2575 = vmatmul.bf16.gmra.mxu0 %v1715
        %v2576 = vpop.f32.mrf.mxu0
        %v2577 = vadd.f32 %v2528, %v2576
        %v2578 = vpop.f32.mrf.mxu0
        %v2579 = vadd.f32 %v2530, %v2578
        %2580 = vmatmul.bf16.gmra.mxu0 %v1724
        %v2581 = vpop.f32.mrf.mxu0
        %v2582 = vadd.f32 %v2533, %v2581
        %v2583 = vpop.f32.mrf.mxu0
        %v2584 = vadd.f32 %v2535, %v2583
        %2585 = vmatmul.bf16.gmra.mxu0 %v1733
        %v2586 = vpop.f32.mrf.mxu0
        %v2587 = vadd.f32 %v2538, %v2586
        %v2588 = vpop.f32.mrf.mxu0
        %v2589 = vadd.f32 %v2540, %v2588
        %2590 = vmatmul.bf16.gmra.mxu0 %v1742
        %v2591 = vpop.f32.mrf.mxu0
        %v2592 = vadd.f32 %v2543, %v2591
        %v2593 = vpop.f32.mrf.mxu0
        %v2594 = vadd.f32 %v2545, %v2593
        %2595 = vmatmul.bf16.gmra.mxu0 %v1751
        %v2596 = vpop.f32.mrf.mxu0
        %v2597 = vadd.f32 %v2548, %v2596
        %v2598 = vpop.f32.mrf.mxu0
        %v2599 = vadd.f32 %v2550, %v2598
        %2600 = vdwg.mxu0
        %2601 = vmatpush.bf16.msra.mxu0 %v2177
        %2602 = vmatpush.bf16.msra.mxu0 %v2176
        %2603 = vmatpush.bf16.msra.mxu0 %v2175
        %2604 = vmatpush.bf16.msra.mxu0 %v2174
        %2605 = vmatpush.bf16.msra.mxu0 %v2173
        %2606 = vmatpush.bf16.msra.mxu0 %v2172
        %2607 = vmatpush.bf16.msra.mxu0 %v2171
        %2608 = vmatpush.bf16.msra.mxu0 %v2170
        %2609 = vmatmul.bf16.gmra.mxu0 %v1689
        %v2610 = vpop.f32.mrf.mxu0
        %v2611 = vadd.f32 %v2562, %v2610
        %v2612 = vpop.f32.mrf.mxu0
        %v2613 = vadd.f32 %v2564, %v2612
        %2614 = vmatmul.bf16.gmra.mxu0 %v1698
        %v2615 = vpop.f32.mrf.mxu0
        %v2616 = vadd.f32 %v2567, %v2615
        %v2617 = vpop.f32.mrf.mxu0
        %v2618 = vadd.f32 %v2569, %v2617
        %2619 = vmatmul.bf16.gmra.mxu0 %v1707
        %v2620 = vpop.f32.mrf.mxu0
        %v2621 = vadd.f32 %v2572, %v2620
        %v2622 = vpop.f32.mrf.mxu0
        %v2623 = vadd.f32 %v2574, %v2622
        %2624 = vmatmul.bf16.gmra.mxu0 %v1716
        %v2625 = vpop.f32.mrf.mxu0
        %v2626 = vadd.f32 %v2577, %v2625
        %v2627 = vpop.f32.mrf.mxu0
        %v2628 = vadd.f32 %v2579, %v2627
        %2629 = vmatmul.bf16.gmra.mxu0 %v1725
        %v2630 = vpop.f32.mrf.mxu0
        %v2631 = vadd.f32 %v2582, %v2630
        %v2632 = vpop.f32.mrf.mxu0
        %v2633 = vadd.f32 %v2584, %v2632
        %2634 = vmatmul.bf16.gmra.mxu0 %v1734
        %v2635 = vpop.f32.mrf.mxu0
        %v2636 = vadd.f32 %v2587, %v2635
        %v2637 = vpop.f32.mrf.mxu0
        %v2638 = vadd.f32 %v2589, %v2637
        %2639 = vmatmul.bf16.gmra.mxu0 %v1743
        %v2640 = vpop.f32.mrf.mxu0
        %v2641 = vadd.f32 %v2592, %v2640
        %v2642 = vpop.f32.mrf.mxu0
        %v2643 = vadd.f32 %v2594, %v2642
        %2644 = vmatmul.bf16.gmra.mxu0 %v1752
        %v2645 = vpop.f32.mrf.mxu0
        %v2646 = vadd.f32 %v2597, %v2645
        %v2647 = vpop.f32.mrf.mxu0
        %v2648 = vadd.f32 %v2599, %v2647
        %2649 = vdwg.mxu0
        %2650 = vmatpush.bf16.msra.mxu0 %v2185
        %2651 = vmatpush.bf16.msra.mxu0 %v2184
        %2652 = vmatpush.bf16.msra.mxu0 %v2183
        %2653 = vmatpush.bf16.msra.mxu0 %v2182
        %2654 = vmatpush.bf16.msra.mxu0 %v2181
        %2655 = vmatpush.bf16.msra.mxu0 %v2180
        %2656 = vmatpush.bf16.msra.mxu0 %v2179
        %2657 = vmatpush.bf16.msra.mxu0 %v2178
        %2658 = vmatmul.bf16.gmra.mxu0 %v1690
        %v2659 = vpop.f32.mrf.mxu0
        %v2660 = vadd.f32 %v2611, %v2659
        %v2661 = vpop.f32.mrf.mxu0
        %v2662 = vadd.f32 %v2613, %v2661
        %2663 = vmatmul.bf16.gmra.mxu0 %v1699
        %v2664 = vpop.f32.mrf.mxu0
        %v2665 = vadd.f32 %v2616, %v2664
        %v2666 = vpop.f32.mrf.mxu0
        %v2667 = vadd.f32 %v2618, %v2666
        %2668 = vmatmul.bf16.gmra.mxu0 %v1708
        %v2669 = vpop.f32.mrf.mxu0
        %v2670 = vadd.f32 %v2621, %v2669
        %v2671 = vpop.f32.mrf.mxu0
        %v2672 = vadd.f32 %v2623, %v2671
        %2673 = vmatmul.bf16.gmra.mxu0 %v1717
        %v2674 = vpop.f32.mrf.mxu0
        %v2675 = vadd.f32 %v2626, %v2674
        %v2676 = vpop.f32.mrf.mxu0
        %v2677 = vadd.f32 %v2628, %v2676
        %2678 = vmatmul.bf16.gmra.mxu0 %v1726
        %v2679 = vpop.f32.mrf.mxu0
        %v2680 = vadd.f32 %v2631, %v2679
        %v2681 = vpop.f32.mrf.mxu0
        %v2682 = vadd.f32 %v2633, %v2681
        %2683 = vmatmul.bf16.gmra.mxu0 %v1735
        %v2684 = vpop.f32.mrf.mxu0
        %v2685 = vadd.f32 %v2636, %v2684
        %v2686 = vpop.f32.mrf.mxu0
        %v2687 = vadd.f32 %v2638, %v2686
        %2688 = vmatmul.bf16.gmra.mxu0 %v1744
        %v2689 = vpop.f32.mrf.mxu0
        %v2690 = vadd.f32 %v2641, %v2689
        %v2691 = vpop.f32.mrf.mxu0
        %v2692 = vadd.f32 %v2643, %v2691
        %2693 = vmatmul.bf16.gmra.mxu0 %v1753
        %v2694 = vpop.f32.mrf.mxu0
        %v2695 = vadd.f32 %v2646, %v2694
        %v2696 = vpop.f32.mrf.mxu0
        %v2697 = vadd.f32 %v2648, %v2696
        %2698 = vdwg.mxu0
        %2699 = vst [vmem:[%s136] sm:$0xff] %v2660
        %2700 = vst [vmem:[%s136 + $0x8] sm:$0xff] %v2662
        %2701 = vst [vmem:[%s136 + $0x10] sm:$0xff] %v2665
        %2702 = vst [vmem:[%s136 + $0x18] sm:$0xff] %v2667
        %2703 = vst [vmem:[%s136 + $0x20] sm:$0xff] %v2670
        %2704 = vst [vmem:[%s136 + $0x28] sm:$0xff] %v2672
        %2705 = vst [vmem:[%s136 + $0x30] sm:$0xff] %v2675
        %2706 = vst [vmem:[%s136 + $0x38] sm:$0xff] %v2677
        %2707 = vst [vmem:[%s136 + $0x40] sm:$0xff] %v2680
        %2708 = vst [vmem:[%s136 + $0x48] sm:$0xff] %v2682
        %2709 = vst [vmem:[%s136 + $0x50] sm:$0xff] %v2685
        %2710 = vst [vmem:[%s136 + $0x58] sm:$0xff] %v2687
        %2711 = vst [vmem:[%s136 + $0x60] sm:$0xff] %v2690
        %2712 = vst [vmem:[%s136 + $0x68] sm:$0xff] %v2692
        %2713 = vst [vmem:[%s136 + $0x70] sm:$0xff] %v2695
        %2714 = vst [vmem:[%s136 + $0x78] sm:$0xff] %v2697
        %s2715 = sand.u32 %s81, 1
        %s2716 = scalar_lea.sflag [#allocation6], %s2715
        %s2717 = sand.u32 %s81, 1
        %s2718 = smul.addr %s2717, 128
        %s2719 = scalar_lea.vmem [#allocation5], %s2718
        // Predicated region
        $region75: #{atrous_conv2d.1} parent=27 // pred_check
          %p2720 = pneg %p91
        $region76: #{atrous_conv2d.1} parent=27 // pred_check_branch
          %2722 = sbr.rel (%p2720) target = $region78
        $region77: #{atrous_conv2d.1} parent=27 // pred_region
          %s2723 = smul.u32 8, %s22
          %2725 = vsyncadd %s2716, 0
          %s2726 = smul.addr %s2723, 2
          %s2727 = smul.addr %s21, 32
          %s2728 = sadd.s32 %s2726, %s2727
          %s2729 = smul.addr %s2728, 8
          %s2730 = scalar_lea.hbm %s3, %s2729
          %s2731 = sshll.u32 %s2719, 4
          %s2732 = int_to_ptr.vmem [resolvable:$true] %s2731
          %s2733 = sshll.u32 %s2730, 4
          %s2734 = int_to_ptr.hbm [resolvable:$true] %s2733
          %2739 = dma.vmem_to_hbm [thread:$0]  %s2732, 2048, %s2734, %s2716, 128, 128, 8
        $region78: #{atrous_conv2d.1} parent=27 // pred_fallthru
          _
      $region28: #{atrous_conv2d.1} parent=5 // pred_fallthru
        _
      %p2740 = scmp.le.s32.totalorder 2, %s12
      // Predicated region
      $region79: #{atrous_conv2d.1} parent=5 // pred_check
        %p2741 = pneg %p2740
      $region80: #{atrous_conv2d.1} parent=5 // pred_check_branch
        %2743 = sbr.rel (%p2741) target = $region82
      $region81: #{atrous_conv2d.1} parent=5 // pred_region
        %s2744 = ssub.s32 %s12, 2
        // Predicated region
        $region83: #{atrous_conv2d.1} parent=81 // pred_check
          %p2745 = pneg %p97
        $region84: #{atrous_conv2d.1} parent=81 // pred_check_branch
          %2747 = sbr.rel (%p2745) target = $region86
        $region85: #{atrous_conv2d.1} parent=81 // pred_region
          %s2748 = sand.u32 %s82, 1
          %s2749 = scalar_lea.sflag [#allocation6], %s2748
          %s2750 = sand.u32 %s82, 1
          %s2751 = smul.addr %s2750, 128
          %s2752 = scalar_lea.vmem [#allocation5], %s2751
          %2754 = dma.done %s2749, 2048
        $region86: #{atrous_conv2d.1} parent=81 // pred_fallthru
          _
      $region82: #{atrous_conv2d.1} parent=5 // pred_fallthru
        _
    $region6: #{atrous_conv2d.1} parent=1 // loop_footer
      %s16 = sadd.s32 1, %s12
    $region7: #{atrous_conv2d.1} parent=1 // loop_footer_branch
      %11 = sbr.rel target = $region3
    $region8: #{atrous_conv2d.1} parent=1 // loop_exit
      _
    %2755 = vsyncpa [#allocation6], 1
    %s2756 = scalar_lea.sflag [#allocation6], 1
    %2757 = vsyncpa %s2756, 1
  %2758 = vsyncmov [#allocation3]
  %s2759 = vpop.sfrf %2758
  %p2760 = scmp.eq.s32.totalorder %s2759, 0
  %p2761 = pneg %p2760
  %2763 = shalt.err (%p2761)
  %s2764 = scalar_lea.sflag [#allocation3], 1
  %2765 = vsyncmov %s2764
  %s2766 = vpop.sfrf %2765
  %p2767 = scmp.eq.s32.totalorder %s2766, 0
  %p2768 = pneg %p2767
  %2770 = shalt.err (%p2768)

</llo_original>
